<compile_context>
chip_gen: v7x
topology: tpu7x:2x2x1
jax: 0.10.0
libtpu: 0.0.40
codegen_flags: <defaults>
</compile_context>

<pallas_src>
import math

import jax
import jax.numpy as jnp
from jax.experimental import pallas as pl
from jax.experimental.pallas import tpu as pltpu

NEG_SLOPE = 0.01  # F.leaky_relu default negative_slope
LANE = 128


def _round_up(x, m):
    return ((x + m - 1) // m) * m


def elm_kernel(x_ref, w1_ref, b1_ref, w2_ref, o_ref):
    """One grid step processes one tile of the (padded) hidden dimension.

    x_ref  : (B, D)        bf16, full input block (resident across steps)
    w1_ref : (D, TH)       bf16, hidden-tile slice of fc1 weight (pre-transposed)
    b1_ref : (1, TH)       f32,  hidden-tile slice of fc1 bias
    w2_ref : (TH, OUT_pad) bf16, hidden-tile slice of fc2 weight (pre-transposed)
    o_ref  : (B, OUT_pad)  f32,  VMEM-resident output block (accumulator)
    """
    k = pl.program_id(0)

    @pl.when(k == 0)
    def _():
        o_ref[...] = jnp.zeros_like(o_ref)

    # fc1 for this hidden tile: bf16 MXU matmul, f32 accumulation, f32 bias add.
    h = jnp.dot(x_ref[...], w1_ref[...], preferred_element_type=jnp.float32)
    h = h + b1_ref[...]
    # leaky_relu
    h = jnp.where(h >= 0, h, NEG_SLOPE * h)
    # fc2 partial contribution, accumulated into the resident output tile.
    o_ref[...] += jnp.dot(h.astype(jnp.bfloat16), w2_ref[...],
                          preferred_element_type=jnp.float32)


def elm_forward(x, w1_t, b1, w2_t, *, tile_h=512):
    """x: (B, D) f32; w1_t: (D, H); b1: (H,); w2_t: (H, OUT). Returns (B, OUT) f32."""
    B, D = x.shape
    Dw, H = w1_t.shape
    assert Dw == D
    Hw, OUT = w2_t.shape
    assert Hw == H

    # Choose the hidden tile: multiple of 128, no larger than the padded H.
    tile_h = min(tile_h, _round_up(H, LANE))
    tile_h = _round_up(tile_h, LANE)
    H_pad = _round_up(H, tile_h)
    OUT_pad = _round_up(OUT, LANE)

    # Cast the streaming operands to bf16; zero-pad hidden / output dims.
    x_b = x.astype(jnp.bfloat16)
    w1_p = jnp.zeros((D, H_pad), jnp.bfloat16).at[:, :H].set(
        w1_t.astype(jnp.bfloat16))
    b1_p = jnp.zeros((1, H_pad), jnp.float32).at[:, :H].set(
        b1.astype(jnp.float32))
    w2_p = jnp.zeros((H_pad, OUT_pad), jnp.bfloat16).at[:H, :OUT].set(
        w2_t.astype(jnp.bfloat16))

    grid = (H_pad // tile_h,)

    # VMEM budget: double-buffered W1/b1/W2 tiles + resident x + output block.
    tile_bytes = 2 * (D * tile_h * 2 + tile_h * 4 + tile_h * OUT_pad * 2)
    resident_bytes = B * D * 2 + B * OUT_pad * 4
    vmem_limit = min(max(2 * (tile_bytes + resident_bytes), 32 * 1024 * 1024),
                     48 * 1024 * 1024)  # stay well under v7x's 64 MiB VMEM

    out_p = pl.pallas_call(
        elm_kernel,
        out_shape=jax.ShapeDtypeStruct((B, OUT_pad), jnp.float32),
        grid_spec=pltpu.PrefetchScalarGridSpec(
            num_scalar_prefetch=0,
            grid=grid,
            in_specs=[
                pl.BlockSpec((B, D), lambda k: (0, 0)),          # x (resident)
                pl.BlockSpec((D, tile_h), lambda k: (0, k)),     # W1^T hidden tile
                pl.BlockSpec((1, tile_h), lambda k: (0, k)),     # b1 hidden tile
                pl.BlockSpec((tile_h, OUT_pad), lambda k: (k, 0)),  # W2^T hidden tile
            ],
            out_specs=pl.BlockSpec((B, OUT_pad), lambda k: (0, 0)),
        ),
        compiler_params=pltpu.CompilerParams(
            dimension_semantics=("arbitrary",),   # reduction over hidden tiles
            vmem_limit_bytes=vmem_limit,
        ),
    )(x_b, w1_p, b1_p, w2_p)

    return out_p[:, :OUT]


def init_params(key, input_dim, hidden_size, out_dim=6):
    """Deterministic synthetic init mirroring the PyTorch module's shapes.

    fc1.weight: xavier_uniform with leaky_relu gain; fc1.bias: U(-1/sqrt(D), 1/sqrt(D));
    fc2.weight: kaiming-uniform-like (nn.Linear default), no bias.
    """
    k1, k2, k3 = jax.random.split(key, 3)
    gain = math.sqrt(2.0 / (1.0 + NEG_SLOPE ** 2))  # calculate_gain('leaky_relu')
    bound1 = gain * math.sqrt(6.0 / (input_dim + hidden_size))
    w1 = jax.random.uniform(k1, (hidden_size, input_dim), jnp.float32,
                            minval=-bound1, maxval=bound1)  # PyTorch layout (H, D)
    bb = 1.0 / math.sqrt(input_dim)
    b1 = jax.random.uniform(k2, (hidden_size,), jnp.float32, minval=-bb, maxval=bb)
    bound2 = math.sqrt(6.0 / hidden_size)
    w2 = jax.random.uniform(k3, (out_dim, hidden_size), jnp.float32,
                            minval=-bound2, maxval=bound2)  # PyTorch layout (OUT, H)
    # Pre-transpose for the kernel: x @ W^T == x @ (W.T)
    return w1.T, b1, w2.T


def reference_forward_f32(x, w1_t, b1, w2_t):
    h = x @ w1_t + b1[None, :]
    h = jnp.where(h >= 0, h, NEG_SLOPE * h)
    return h @ w2_t


def reference_forward_bf16(x, w1_t, b1, w2_t):
    """Same bf16 casts as the kernel, math in f32 (tight comparison target)."""
    xb = x.astype(jnp.bfloat16).astype(jnp.float32)
    w1b = w1_t.astype(jnp.bfloat16).astype(jnp.float32)
    w2b = w2_t.astype(jnp.bfloat16).astype(jnp.float32)
    h = xb @ w1b + b1[None, :]
    h = jnp.where(h >= 0, h, NEG_SLOPE * h)
    hb = h.astype(jnp.bfloat16).astype(jnp.float32)
    return hb @ w2b


if __name__ == "__main__":
    # Small shapes consistent with the module: x of shape (B, C, H, W) flattened
    # to (B, C*H*W); hidden_size kept small (300, deliberately NOT a multiple of
    # 128 to exercise hidden-dim padding) instead of 7000; output dim 6.
    B, C, Himg, Wimg = 2, 4, 16, 16
    input_dim = C * Himg * Wimg          # 1024
    hidden_size = 300
    out_dim = 6

    key = jax.random.PRNGKey(0)
    kx, kp = jax.random.split(key)
    x_nchw = jax.random.normal(kx, (B, C, Himg, Wimg), jnp.float32)
    x = x_nchw.reshape(B, -1)            # x.view(x.size(0), -1)

    w1_t, b1, w2_t = init_params(kp, input_dim, hidden_size, out_dim)

    ref_bf16 = reference_forward_bf16(x, w1_t, b1, w2_t)
    ref_f32 = reference_forward_f32(x, w1_t, b1, w2_t)

    # Single-step variant (whole padded hidden dim in one tile).
    out1 = jax.block_until_ready(elm_forward(x, w1_t, b1, w2_t, tile_h=512))
    # Multi-step reduction variant (exercises the accumulate-over-hidden path).
    out2 = jax.block_until_ready(elm_forward(x, w1_t, b1, w2_t, tile_h=128))

    for out in (out1, out2):
        assert out.shape == (B, out_dim)
        # Tight check vs. a reference using the identical bf16 casts.
        assert jnp.allclose(out, ref_bf16, atol=5e-3, rtol=5e-3), \
            "mismatch vs bf16-cast reference"
        # Loose check vs. the pure-f32 PyTorch-equivalent forward.
        assert jnp.allclose(out, ref_f32, atol=5e-2, rtol=5e-2), \
            "mismatch vs f32 reference"

    print("KERNEL_OK")
</pallas_src>

<mosaic_0001>
module attributes {stable_mosaic.version = 11 : i64} {
  func.func @elm_kernel(%arg0: i32, %arg1: memref<2x1024xbf16, #tpu.memory_space<vmem>>, %arg2: memref<1024x384xbf16, #tpu.memory_space<vmem>>, %arg3: memref<1x384xf32, #tpu.memory_space<vmem>>, %arg4: memref<384x128xbf16, #tpu.memory_space<vmem>>, %arg5: memref<2x128xf32, #tpu.memory_space<vmem>>) attributes {dimension_semantics = [#tpu.dimension_semantics<arbitrary>], iteration_bounds = array<i64: 1>, scalar_prefetch = 0 : i64, scratch_operands = 0 : i64, tpu.core_type = #tpu.core_type<tc>, window_params = [{pipeline_mode = #tpu.pipeline_mode<synchronous>, transform_indices = @transform_0, window_bounds = array<i64: 2, 1024>}, {transform_indices = @transform_1, window_bounds = array<i64: 1024, 384>}, {transform_indices = @transform_2, window_bounds = array<i64: 1, 384>}, {transform_indices = @transform_3, window_bounds = array<i64: 384, 128>}, {pipeline_mode = #tpu.pipeline_mode<synchronous>, transform_indices = @transform_4, window_bounds = array<i64: 2, 128>}]} {
    %c0_i32 = arith.constant 0 : i32
    %0 = arith.cmpi eq, %arg0, %c0_i32 : i32
    %1 = arith.extui %0 : i1 to i32
    %c0_i32_0 = arith.constant 0 : i32
    %2 = arith.cmpi ne, %1, %c0_i32_0 : i32
    scf.if %2 {
      %cst_15 = arith.constant 0.000000e+00 : f32
      %20 = vector.broadcast %cst_15 : f32 to vector<2x128xf32>
      %c0_16 = arith.constant 0 : index
      %c0_17 = arith.constant 0 : index
      %21 = vector.load %arg5[%c0_16, %c0_17] : memref<2x128xf32, #tpu.memory_space<vmem>>, vector<2x128xf32>
      tpu.vector_store %arg5[%c0_16, %c0_17], %20 {strides = array<i32>} : memref<2x128xf32, #tpu.memory_space<vmem>>, vector<2x128xf32>,
    } else {
    }
    %c0 = arith.constant 0 : index
    %c0_1 = arith.constant 0 : index
    %3 = vector.load %arg1[%c0, %c0_1] : memref<2x1024xbf16, #tpu.memory_space<vmem>>, vector<2x1024xbf16>
    %c0_2 = arith.constant 0 : index
    %c0_3 = arith.constant 0 : index
    %4 = vector.load %arg2[%c0_2, %c0_3] : memref<1024x384xbf16, #tpu.memory_space<vmem>>, vector<1024x384xbf16>
    %cst = arith.constant dense<0.000000e+00> : vector<2x384xf32>
    %5 = tpu.matmul %3, %4, %cst {dimension_numbers = #tpu.dot_dimension_numbers<[1], [0], [0], [1], [0, 0, 1, 1], [], []>} : vector<2x1024xbf16>, vector<1024x384xbf16>, vector<2x384xf32> -> vector<2x384xf32>
    %c0_4 = arith.constant 0 : index
    %c0_5 = arith.constant 0 : index
    %6 = vector.load %arg3[%c0_4, %c0_5] : memref<1x384xf32, #tpu.memory_space<vmem>>, vector<1x384xf32>
    %7 = vector.broadcast %6 : vector<1x384xf32> to vector<2x384xf32>
    %8 = arith.addf %5, %7 : vector<2x384xf32>
    %cst_6 = arith.constant 0.000000e+00 : f32
    %9 = vector.broadcast %cst_6 : f32 to vector<2x384xf32>
    %10 = arith.cmpf oge, %8, %9 : vector<2x384xf32>
    %cst_7 = arith.constant 0.00999999977 : f32
    %11 = vector.broadcast %cst_7 : f32 to vector<2x384xf32>
    %12 = arith.mulf %11, %8 : vector<2x384xf32>
    %13 = arith.select %10, %8, %12 : vector<2x384xi1>, vector<2x384xf32>
    %c0_8 = arith.constant 0 : index
    %c0_9 = arith.constant 0 : index
    %14 = vector.load %arg5[%c0_8, %c0_9] : memref<2x128xf32, #tpu.memory_space<vmem>>, vector<2x128xf32>
    %15 = arith.truncf %13 : vector<2x384xf32> to vector<2x384xbf16>
    %c0_10 = arith.constant 0 : index
    %c0_11 = arith.constant 0 : index
    %16 = vector.load %arg4[%c0_10, %c0_11] : memref<384x128xbf16, #tpu.memory_space<vmem>>, vector<384x128xbf16>
    %cst_12 = arith.constant dense<0.000000e+00> : vector<2x128xf32>
    %17 = tpu.matmul %15, %16, %cst_12 {dimension_numbers = #tpu.dot_dimension_numbers<[1], [0], [0], [1], [0, 0, 1, 1], [], []>} : vector<2x384xbf16>, vector<384x128xbf16>, vector<2x128xf32> -> vector<2x128xf32>
    %18 = arith.addf %14, %17 : vector<2x128xf32>
    %c0_13 = arith.constant 0 : index
    %c0_14 = arith.constant 0 : index
    %19 = vector.load %arg5[%c0_13, %c0_14] : memref<2x128xf32, #tpu.memory_space<vmem>>, vector<2x128xf32>
    tpu.vector_store %arg5[%c0_13, %c0_14], %18 {strides = array<i32>} : memref<2x128xf32, #tpu.memory_space<vmem>>, vector<2x128xf32>,
    return
  }
  func.func @transform_0(%arg0: i32) -> (i32, i32) {
    %c0_i32 = arith.constant 0 : i32
    %c0_i32_0 = arith.constant 0 : i32
    %c0_i32_1 = arith.constant 0 : i32
    return %c0_i32, %c0_i32_0 : i32, i32
  }
  func.func @transform_1(%arg0: i32) -> (i32, i32) {
    %c0_i32 = arith.constant 0 : i32
    %c0_i32_0 = arith.constant 0 : i32
    return %c0_i32, %arg0 : i32, i32
  }
  func.func @transform_2(%arg0: i32) -> (i32, i32) {
    %c0_i32 = arith.constant 0 : i32
    %c0_i32_0 = arith.constant 0 : i32
    return %c0_i32, %arg0 : i32, i32
  }
  func.func @transform_3(%arg0: i32) -> (i32, i32) {
    %c0_i32 = arith.constant 0 : i32
    %c0_i32_0 = arith.constant 0 : i32
    return %arg0, %c0_i32 : i32, i32
  }
  func.func @transform_4(%arg0: i32) -> (i32, i32) {
    %c0_i32 = arith.constant 0 : i32
    %c0_i32_0 = arith.constant 0 : i32
    %c0_i32_1 = arith.constant 0 : i32
    return %c0_i32, %c0_i32_0 : i32, i32
  }
}

</mosaic_0001>

<llo_original>
// kernel: tpu_custom_call.1
$region0: #{tpu_custom_call.1}
  #allocation0 [shape = 'u32[]', space=smem, size = 0x4, offset = 0x4, fixed_abs, tag = 'smem constant byte address 0x4 - core index']
  #allocation1 [shape = 'u32[144,128]{1,0:T(1,128)}', space=vmem, size = 0x12000, scoped, tag = 'internal scratch']
  %s0 = inlined_call_operand.hbm [shape: bf16[2,1024], index: 0, kind: input, shape index: {}]
  %s1 = inlined_call_operand.hbm [shape: bf16[1024,384], index: 1, kind: input, shape index: {}]
  %s2 = inlined_call_operand.vmem [shape: f32[1,384], index: 2, kind: input, shape index: {}]
  %s3 = inlined_call_operand.hbm [shape: bf16[384,128], index: 3, kind: input, shape index: {}]
  %s4 = inlined_call_operand.hbm [shape: f32[2,128], index: 4, kind: output, shape index: {}]
  %s5 = sld [smem:[#allocation0]]
  $region42: #{tpu_custom_call.1} parent=0
    _
  %s7 = ssub.s32 1, %s5
  %s8 = scalar_select 0, %s7, %s5
  $region1: #{tpu_custom_call.1} parent=0
    #allocation2 [shape = 'u8[4096]{0}', space=vmem, size = 0x1000, scoped, tag = 'input window, operand 0, single buffered']
    #allocation3 [shape = 's32[1]{0}', space=sflag, size = 0x4, scoped, tag = 'scoped memory for tpu_custom_call.1']
    #allocation4 [shape = 's32[1]{0}', space=sflag, size = 0x4, scoped, tag = 'scoped memory for tpu_custom_call.1']
    #allocation5 [shape = 'u8[786432]{0}', space=vmem, size = 0xc0000, scoped, tag = 'input window, operand 1, single buffered']
    #allocation6 [shape = 's32[1]{0}', space=sflag, size = 0x4, scoped, tag = 'scoped memory for tpu_custom_call.1']
    #allocation7 [shape = 'u8[98304]{0}', space=vmem, size = 0x18000, scoped, tag = 'input window, operand 3, single buffered']
    #allocation8 [shape = 'u8[1024]{0}', space=vmem, size = 0x400, scoped, tag = 'output window, operand 0, single buffered']
    %9 = vsyncpa [#allocation3], 0
    %10 = vsyncpa [#allocation6], 0
    %11 = vsyncpa [#allocation4], 0
    // Predicated region
    $region2: #{tpu_custom_call.1} parent=1 // pred_check
      _
    $region3: #{tpu_custom_call.1} parent=1 // pred_check_branch
      %13 = sbr.rel (0) target = $region5
    $region4: #{tpu_custom_call.1} parent=1 // pred_region
      %s15 = ssub.s32 128, 128
      %16 = vsyncadd [#allocation3], %s15
      %s18 = sshll.u32 [#allocation2], 4
      %s19 = int_to_ptr.vmem [resolvable:$true] %s18
      %21 = dma.hbm_to_vmem [thread:$0]  %s0, 128, %s19, [#allocation3]
    $region5: #{tpu_custom_call.1} parent=1 // pred_fallthru
      _
    // Predicated region
    $region6: #{tpu_custom_call.1} parent=1 // pred_check
      _
    $region7: #{tpu_custom_call.1} parent=1 // pred_check_branch
      %23 = sbr.rel (0) target = $region9
    $region8: #{tpu_custom_call.1} parent=1 // pred_region
      %s25 = ssub.s32 24576, 24576
      %26 = vsyncadd [#allocation6], %s25
      %s27 = sshll.u32 [#allocation5], 4
      %s28 = int_to_ptr.vmem [resolvable:$true] %s27
      %33 = dma.hbm_to_vmem [thread:$0]  %s1, 24576, %s28, [#allocation6], 192, 192, 12
    $region9: #{tpu_custom_call.1} parent=1 // pred_fallthru
      _
    // Predicated region
    $region10: #{tpu_custom_call.1} parent=1 // pred_check
      _
    $region11: #{tpu_custom_call.1} parent=1 // pred_check_branch
      %35 = sbr.rel (0) target = $region13
    $region12: #{tpu_custom_call.1} parent=1 // pred_region
      _
    $region13: #{tpu_custom_call.1} parent=1 // pred_fallthru
      _
    // Predicated region
    $region14: #{tpu_custom_call.1} parent=1 // pred_check
      _
    $region15: #{tpu_custom_call.1} parent=1 // pred_check_branch
      %37 = sbr.rel (0) target = $region17
    $region16: #{tpu_custom_call.1} parent=1 // pred_region
      %s39 = ssub.s32 3072, 3072
      %40 = vsyncadd [#allocation6], %s39
      %s41 = sshll.u32 [#allocation7], 4
      %s42 = int_to_ptr.vmem [resolvable:$true] %s41
      %47 = dma.hbm_to_vmem [thread:$0]  %s3, 3072, %s42, [#allocation6], 64, 64, 4
    $region17: #{tpu_custom_call.1} parent=1 // pred_fallthru
      _
    // Predicated region
    $region18: #{tpu_custom_call.1} parent=1 // pred_check
      _
    $region19: #{tpu_custom_call.1} parent=1 // pred_check_branch
      %49 = sbr.rel (0) target = $region21
    $region20: #{tpu_custom_call.1} parent=1 // pred_region
      %50 = dma.done [#allocation3], 128
    $region21: #{tpu_custom_call.1} parent=1 // pred_fallthru
      _
    // Predicated region
    $region22: #{tpu_custom_call.1} parent=1 // pred_check
      _
    $region23: #{tpu_custom_call.1} parent=1 // pred_check_branch
      %52 = sbr.rel (0) target = $region25
    $region24: #{tpu_custom_call.1} parent=1 // pred_region
      %53 = dma.done [#allocation6], 24576
    $region25: #{tpu_custom_call.1} parent=1 // pred_fallthru
      _
    // Predicated region
    $region26: #{tpu_custom_call.1} parent=1 // pred_check
      _
    $region27: #{tpu_custom_call.1} parent=1 // pred_check_branch
      %55 = sbr.rel (0) target = $region29
    $region28: #{tpu_custom_call.1} parent=1 // pred_region
      %56 = dma.done [#allocation6], 3072
    $region29: #{tpu_custom_call.1} parent=1 // pred_fallthru
      _
    %p58 = scmp.eq.s32.totalorder 0, 0
    // Predicated region
    $region30: #{tpu_custom_call.1} parent=1 // pred_check
      %p59 = pneg %p58
    $region31: #{tpu_custom_call.1} parent=1 // pred_check_branch
      %61 = sbr.rel (%p59) target = $region33
    $region32: #{tpu_custom_call.1} parent=1 // pred_region
      %62 = vst [vmem:[#allocation8] sm:$0x3] 0.0
    $region33: #{tpu_custom_call.1} parent=1 // pred_fallthru
      _
    %v63 = vld [vmem:[#allocation2] sm:$0xff]
    %v64 = vld [vmem:[#allocation5] sm:$0xff]
    %v65 = vld [vmem:[#allocation5 + $0x8] sm:$0xf]
    %v66 = vld [vmem:[#allocation5 + $0xc] sm:$0xff]
    %v67 = vld [vmem:[#allocation5 + $0x14] sm:$0xf]
    %v68 = vld [vmem:[#allocation5 + $0x18] sm:$0xff]
    %v69 = vld [vmem:[#allocation5 + $0x20] sm:$0xf]
    %v70 = vld [vmem:[#allocation5 + $0x24] sm:$0xff]
    %v71 = vld [vmem:[#allocation5 + $0x2c] sm:$0xf]
    %v72 = vld [vmem:[#allocation5 + $0x30] sm:$0xff]
    %v73 = vld [vmem:[#allocation5 + $0x38] sm:$0xf]
    %v74 = vld [vmem:[#allocation5 + $0x3c] sm:$0xff]
    %v75 = vld [vmem:[#allocation5 + $0x44] sm:$0xf]
    %v76 = vld [vmem:[#allocation5 + $0x48] sm:$0xff]
    %v77 = vld [vmem:[#allocation5 + $0x50] sm:$0xf]
    %v78 = vld [vmem:[#allocation5 + $0x54] sm:$0xff]
    %v79 = vld [vmem:[#allocation5 + $0x5c] sm:$0xf]
    %v80 = vld [vmem:[#allocation5 + $0x60] sm:$0xff]
    %v81 = vld [vmem:[#allocation5 + $0x68] sm:$0xf]
    %v82 = vld [vmem:[#allocation5 + $0x6c] sm:$0xff]
    %v83 = vld [vmem:[#allocation5 + $0x74] sm:$0xf]
    %v84 = vld [vmem:[#allocation5 + $0x78] sm:$0xff]
    %v85 = vld [vmem:[#allocation5 + $0x80] sm:$0xf]
    %v86 = vld [vmem:[#allocation5 + $0x84] sm:$0xff]
    %v87 = vld [vmem:[#allocation5 + $0x8c] sm:$0xf]
    %v88 = vld [vmem:[#allocation5 + $0x90] sm:$0xff]
    %v89 = vld [vmem:[#allocation5 + $0x98] sm:$0xf]
    %v90 = vld [vmem:[#allocation5 + $0x9c] sm:$0xff]
    %v91 = vld [vmem:[#allocation5 + $0xa4] sm:$0xf]
    %v92 = vld [vmem:[#allocation5 + $0xa8] sm:$0xff]
    %v93 = vld [vmem:[#allocation5 + $0xb0] sm:$0xf]
    %v94 = vld [vmem:[#allocation5 + $0xb4] sm:$0xff]
    %v95 = vld [vmem:[#allocation5 + $0xbc] sm:$0xf]
    %v96 = vld [vmem:[#allocation5 + $0xc0] sm:$0xff]
    %v97 = vld [vmem:[#allocation5 + $0xc8] sm:$0xf]
    %v98 = vld [vmem:[#allocation5 + $0xcc] sm:$0xff]
    %v99 = vld [vmem:[#allocation5 + $0xd4] sm:$0xf]
    %v100 = vld [vmem:[#allocation5 + $0xd8] sm:$0xff]
    %v101 = vld [vmem:[#allocation5 + $0xe0] sm:$0xf]
    %v102 = vld [vmem:[#allocation5 + $0xe4] sm:$0xff]
    %v103 = vld [vmem:[#allocation5 + $0xec] sm:$0xf]
    %v104 = vld [vmem:[#allocation5 + $0xf0] sm:$0xff]
    %v105 = vld [vmem:[#allocation5 + $0xf8] sm:$0xf]
    %v106 = vld [vmem:[#allocation5 + $0xfc] sm:$0xff]
    %v107 = vld [vmem:[#allocation5 + $0x104] sm:$0xf]
    %v108 = vld [vmem:[#allocation5 + $0x108] sm:$0xff]
    %v109 = vld [vmem:[#allocation5 + $0x110] sm:$0xf]
    %v110 = vld [vmem:[#allocation5 + $0x114] sm:$0xff]
    %v111 = vld [vmem:[#allocation5 + $0x11c] sm:$0xf]
    %v112 = vld [vmem:[#allocation5 + $0x120] sm:$0xff]
    %v113 = vld [vmem:[#allocation5 + $0x128] sm:$0xf]
    %v114 = vld [vmem:[#allocation5 + $0x12c] sm:$0xff]
    %v115 = vld [vmem:[#allocation5 + $0x134] sm:$0xf]
    %v116 = vld [vmem:[#allocation5 + $0x138] sm:$0xff]
    %v117 = vld [vmem:[#allocation5 + $0x140] sm:$0xf]
    %v118 = vld [vmem:[#allocation5 + $0x144] sm:$0xff]
    %v119 = vld [vmem:[#allocation5 + $0x14c] sm:$0xf]
    %v120 = vld [vmem:[#allocation5 + $0x150] sm:$0xff]
    %v121 = vld [vmem:[#allocation5 + $0x158] sm:$0xf]
    %v122 = vld [vmem:[#allocation5 + $0x15c] sm:$0xff]
    %v123 = vld [vmem:[#allocation5 + $0x164] sm:$0xf]
    %v124 = vld [vmem:[#allocation5 + $0x168] sm:$0xff]
    %v125 = vld [vmem:[#allocation5 + $0x170] sm:$0xf]
    %v126 = vld [vmem:[#allocation5 + $0x174] sm:$0xff]
    %v127 = vld [vmem:[#allocation5 + $0x17c] sm:$0xf]
    %v128 = vld [vmem:[#allocation5 + $0x180] sm:$0xff]
    %v129 = vld [vmem:[#allocation5 + $0x188] sm:$0xf]
    %v130 = vld [vmem:[#allocation5 + $0x18c] sm:$0xff]
    %v131 = vld [vmem:[#allocation5 + $0x194] sm:$0xf]
    %v132 = vld [vmem:[#allocation5 + $0x198] sm:$0xff]
    %v133 = vld [vmem:[#allocation5 + $0x1a0] sm:$0xf]
    %v134 = vld [vmem:[#allocation5 + $0x1a4] sm:$0xff]
    %v135 = vld [vmem:[#allocation5 + $0x1ac] sm:$0xf]
    %v136 = vld [vmem:[#allocation5 + $0x1b0] sm:$0xff]
    %v137 = vld [vmem:[#allocation5 + $0x1b8] sm:$0xf]
    %v138 = vld [vmem:[#allocation5 + $0x1bc] sm:$0xff]
    %v139 = vld [vmem:[#allocation5 + $0x1c4] sm:$0xf]
    %v140 = vld [vmem:[#allocation5 + $0x1c8] sm:$0xff]
    %v141 = vld [vmem:[#allocation5 + $0x1d0] sm:$0xf]
    %v142 = vld [vmem:[#allocation5 + $0x1d4] sm:$0xff]
    %v143 = vld [vmem:[#allocation5 + $0x1dc] sm:$0xf]
    %v144 = vld [vmem:[#allocation5 + $0x1e0] sm:$0xff]
    %v145 = vld [vmem:[#allocation5 + $0x1e8] sm:$0xf]
    %v146 = vld [vmem:[#allocation5 + $0x1ec] sm:$0xff]
    %v147 = vld [vmem:[#allocation5 + $0x1f4] sm:$0xf]
    %v148 = vld [vmem:[#allocation5 + $0x1f8] sm:$0xff]
    %v149 = vld [vmem:[#allocation5 + $0x200] sm:$0xf]
    %v150 = vld [vmem:[#allocation5 + $0x204] sm:$0xff]
    %v151 = vld [vmem:[#allocation5 + $0x20c] sm:$0xf]
    %v152 = vld [vmem:[#allocation5 + $0x210] sm:$0xff]
    %v153 = vld [vmem:[#allocation5 + $0x218] sm:$0xf]
    %v154 = vld [vmem:[#allocation5 + $0x21c] sm:$0xff]
    %v155 = vld [vmem:[#allocation5 + $0x224] sm:$0xf]
    %v156 = vld [vmem:[#allocation5 + $0x228] sm:$0xff]
    %v157 = vld [vmem:[#allocation5 + $0x230] sm:$0xf]
    %v158 = vld [vmem:[#allocation5 + $0x234] sm:$0xff]
    %v159 = vld [vmem:[#allocation5 + $0x23c] sm:$0xf]
    %v160 = vld [vmem:[#allocation5 + $0x240] sm:$0xff]
    %v161 = vld [vmem:[#allocation5 + $0x248] sm:$0xf]
    %v162 = vld [vmem:[#allocation5 + $0x24c] sm:$0xff]
    %v163 = vld [vmem:[#allocation5 + $0x254] sm:$0xf]
    %v164 = vld [vmem:[#allocation5 + $0x258] sm:$0xff]
    %v165 = vld [vmem:[#allocation5 + $0x260] sm:$0xf]
    %v166 = vld [vmem:[#allocation5 + $0x264] sm:$0xff]
    %v167 = vld [vmem:[#allocation5 + $0x26c] sm:$0xf]
    %v168 = vld [vmem:[#allocation5 + $0x270] sm:$0xff]
    %v169 = vld [vmem:[#allocation5 + $0x278] sm:$0xf]
    %v170 = vld [vmem:[#allocation5 + $0x27c] sm:$0xff]
    %v171 = vld [vmem:[#allocation5 + $0x284] sm:$0xf]
    %v172 = vld [vmem:[#allocation5 + $0x288] sm:$0xff]
    %v173 = vld [vmem:[#allocation5 + $0x290] sm:$0xf]
    %v174 = vld [vmem:[#allocation5 + $0x294] sm:$0xff]
    %v175 = vld [vmem:[#allocation5 + $0x29c] sm:$0xf]
    %v176 = vld [vmem:[#allocation5 + $0x2a0] sm:$0xff]
    %v177 = vld [vmem:[#allocation5 + $0x2a8] sm:$0xf]
    %v178 = vld [vmem:[#allocation5 + $0x2ac] sm:$0xff]
    %v179 = vld [vmem:[#allocation5 + $0x2b4] sm:$0xf]
    %v180 = vld [vmem:[#allocation5 + $0x2b8] sm:$0xff]
    %v181 = vld [vmem:[#allocation5 + $0x2c0] sm:$0xf]
    %v182 = vld [vmem:[#allocation5 + $0x2c4] sm:$0xff]
    %v183 = vld [vmem:[#allocation5 + $0x2cc] sm:$0xf]
    %v184 = vld [vmem:[#allocation5 + $0x2d0] sm:$0xff]
    %v185 = vld [vmem:[#allocation5 + $0x2d8] sm:$0xf]
    %v186 = vld [vmem:[#allocation5 + $0x2dc] sm:$0xff]
    %v187 = vld [vmem:[#allocation5 + $0x2e4] sm:$0xf]
    %v188 = vld [vmem:[#allocation5 + $0x2e8] sm:$0xff]
    %v189 = vld [vmem:[#allocation5 + $0x2f0] sm:$0xf]
    %v190 = vld [vmem:[#allocation5 + $0x2f4] sm:$0xff]
    %v191 = vld [vmem:[#allocation5 + $0x2fc] sm:$0xf]
    %v192 = vld [vmem:[#allocation5 + $0x300] sm:$0xff]
    %v193 = vld [vmem:[#allocation5 + $0x308] sm:$0xf]
    %v194 = vld [vmem:[#allocation5 + $0x30c] sm:$0xff]
    %v195 = vld [vmem:[#allocation5 + $0x314] sm:$0xf]
    %v196 = vld [vmem:[#allocation5 + $0x318] sm:$0xff]
    %v197 = vld [vmem:[#allocation5 + $0x320] sm:$0xf]
    %v198 = vld [vmem:[#allocation5 + $0x324] sm:$0xff]
    %v199 = vld [vmem:[#allocation5 + $0x32c] sm:$0xf]
    %v200 = vld [vmem:[#allocation5 + $0x330] sm:$0xff]
    %v201 = vld [vmem:[#allocation5 + $0x338] sm:$0xf]
    %v202 = vld [vmem:[#allocation5 + $0x33c] sm:$0xff]
    %v203 = vld [vmem:[#allocation5 + $0x344] sm:$0xf]
    %v204 = vld [vmem:[#allocation5 + $0x348] sm:$0xff]
    %v205 = vld [vmem:[#allocation5 + $0x350] sm:$0xf]
    %v206 = vld [vmem:[#allocation5 + $0x354] sm:$0xff]
    %v207 = vld [vmem:[#allocation5 + $0x35c] sm:$0xf]
    %v208 = vld [vmem:[#allocation5 + $0x360] sm:$0xff]
    %v209 = vld [vmem:[#allocation5 + $0x368] sm:$0xf]
    %v210 = vld [vmem:[#allocation5 + $0x36c] sm:$0xff]
    %v211 = vld [vmem:[#allocation5 + $0x374] sm:$0xf]
    %v212 = vld [vmem:[#allocation5 + $0x378] sm:$0xff]
    %v213 = vld [vmem:[#allocation5 + $0x380] sm:$0xf]
    %v214 = vld [vmem:[#allocation5 + $0x384] sm:$0xff]
    %v215 = vld [vmem:[#allocation5 + $0x38c] sm:$0xf]
    %v216 = vld [vmem:[#allocation5 + $0x390] sm:$0xff]
    %v217 = vld [vmem:[#allocation5 + $0x398] sm:$0xf]
    %v218 = vld [vmem:[#allocation5 + $0x39c] sm:$0xff]
    %v219 = vld [vmem:[#allocation5 + $0x3a4] sm:$0xf]
    %v220 = vld [vmem:[#allocation5 + $0x3a8] sm:$0xff]
    %v221 = vld [vmem:[#allocation5 + $0x3b0] sm:$0xf]
    %v222 = vld [vmem:[#allocation5 + $0x3b4] sm:$0xff]
    %v223 = vld [vmem:[#allocation5 + $0x3bc] sm:$0xf]
    %v224 = vld [vmem:[#allocation5 + $0x3c0] sm:$0xff]
    %v225 = vld [vmem:[#allocation5 + $0x3c8] sm:$0xf]
    %v226 = vld [vmem:[#allocation5 + $0x3cc] sm:$0xff]
    %v227 = vld [vmem:[#allocation5 + $0x3d4] sm:$0xf]
    %v228 = vld [vmem:[#allocation5 + $0x3d8] sm:$0xff]
    %v229 = vld [vmem:[#allocation5 + $0x3e0] sm:$0xf]
    %v230 = vld [vmem:[#allocation5 + $0x3e4] sm:$0xff]
    %v231 = vld [vmem:[#allocation5 + $0x3ec] sm:$0xf]
    %v232 = vld [vmem:[#allocation5 + $0x3f0] sm:$0xff]
    %v233 = vld [vmem:[#allocation5 + $0x3f8] sm:$0xf]
    %v234 = vld [vmem:[#allocation5 + $0x3fc] sm:$0xff]
    %v235 = vld [vmem:[#allocation5 + $0x404] sm:$0xf]
    %v236 = vld [vmem:[#allocation5 + $0x408] sm:$0xff]
    %v237 = vld [vmem:[#allocation5 + $0x410] sm:$0xf]
    %v238 = vld [vmem:[#allocation5 + $0x414] sm:$0xff]
    %v239 = vld [vmem:[#allocation5 + $0x41c] sm:$0xf]
    %v240 = vld [vmem:[#allocation5 + $0x420] sm:$0xff]
    %v241 = vld [vmem:[#allocation5 + $0x428] sm:$0xf]
    %v242 = vld [vmem:[#allocation5 + $0x42c] sm:$0xff]
    %v243 = vld [vmem:[#allocation5 + $0x434] sm:$0xf]
    %v244 = vld [vmem:[#allocation5 + $0x438] sm:$0xff]
    %v245 = vld [vmem:[#allocation5 + $0x440] sm:$0xf]
    %v246 = vld [vmem:[#allocation5 + $0x444] sm:$0xff]
    %v247 = vld [vmem:[#allocation5 + $0x44c] sm:$0xf]
    %v248 = vld [vmem:[#allocation5 + $0x450] sm:$0xff]
    %v249 = vld [vmem:[#allocation5 + $0x458] sm:$0xf]
    %v250 = vld [vmem:[#allocation5 + $0x45c] sm:$0xff]
    %v251 = vld [vmem:[#allocation5 + $0x464] sm:$0xf]
    %v252 = vld [vmem:[#allocation5 + $0x468] sm:$0xff]
    %v253 = vld [vmem:[#allocation5 + $0x470] sm:$0xf]
    %v254 = vld [vmem:[#allocation5 + $0x474] sm:$0xff]
    %v255 = vld [vmem:[#allocation5 + $0x47c] sm:$0xf]
    %v256 = vld [vmem:[#allocation5 + $0x480] sm:$0xff]
    %v257 = vld [vmem:[#allocation5 + $0x488] sm:$0xf]
    %v258 = vld [vmem:[#allocation5 + $0x48c] sm:$0xff]
    %v259 = vld [vmem:[#allocation5 + $0x494] sm:$0xf]
    %v260 = vld [vmem:[#allocation5 + $0x498] sm:$0xff]
    %v261 = vld [vmem:[#allocation5 + $0x4a0] sm:$0xf]
    %v262 = vld [vmem:[#allocation5 + $0x4a4] sm:$0xff]
    %v263 = vld [vmem:[#allocation5 + $0x4ac] sm:$0xf]
    %v264 = vld [vmem:[#allocation5 + $0x4b0] sm:$0xff]
    %v265 = vld [vmem:[#allocation5 + $0x4b8] sm:$0xf]
    %v266 = vld [vmem:[#allocation5 + $0x4bc] sm:$0xff]
    %v267 = vld [vmem:[#allocation5 + $0x4c4] sm:$0xf]
    %v268 = vld [vmem:[#allocation5 + $0x4c8] sm:$0xff]
    %v269 = vld [vmem:[#allocation5 + $0x4d0] sm:$0xf]
    %v270 = vld [vmem:[#allocation5 + $0x4d4] sm:$0xff]
    %v271 = vld [vmem:[#allocation5 + $0x4dc] sm:$0xf]
    %v272 = vld [vmem:[#allocation5 + $0x4e0] sm:$0xff]
    %v273 = vld [vmem:[#allocation5 + $0x4e8] sm:$0xf]
    %v274 = vld [vmem:[#allocation5 + $0x4ec] sm:$0xff]
    %v275 = vld [vmem:[#allocation5 + $0x4f4] sm:$0xf]
    %v276 = vld [vmem:[#allocation5 + $0x4f8] sm:$0xff]
    %v277 = vld [vmem:[#allocation5 + $0x500] sm:$0xf]
    %v278 = vld [vmem:[#allocation5 + $0x504] sm:$0xff]
    %v279 = vld [vmem:[#allocation5 + $0x50c] sm:$0xf]
    %v280 = vld [vmem:[#allocation5 + $0x510] sm:$0xff]
    %v281 = vld [vmem:[#allocation5 + $0x518] sm:$0xf]
    %v282 = vld [vmem:[#allocation5 + $0x51c] sm:$0xff]
    %v283 = vld [vmem:[#allocation5 + $0x524] sm:$0xf]
    %v284 = vld [vmem:[#allocation5 + $0x528] sm:$0xff]
    %v285 = vld [vmem:[#allocation5 + $0x530] sm:$0xf]
    %v286 = vld [vmem:[#allocation5 + $0x534] sm:$0xff]
    %v287 = vld [vmem:[#allocation5 + $0x53c] sm:$0xf]
    %v288 = vld [vmem:[#allocation5 + $0x540] sm:$0xff]
    %v289 = vld [vmem:[#allocation5 + $0x548] sm:$0xf]
    %v290 = vld [vmem:[#allocation5 + $0x54c] sm:$0xff]
    %v291 = vld [vmem:[#allocation5 + $0x554] sm:$0xf]
    %v292 = vld [vmem:[#allocation5 + $0x558] sm:$0xff]
    %v293 = vld [vmem:[#allocation5 + $0x560] sm:$0xf]
    %v294 = vld [vmem:[#allocation5 + $0x564] sm:$0xff]
    %v295 = vld [vmem:[#allocation5 + $0x56c] sm:$0xf]
    %v296 = vld [vmem:[#allocation5 + $0x570] sm:$0xff]
    %v297 = vld [vmem:[#allocation5 + $0x578] sm:$0xf]
    %v298 = vld [vmem:[#allocation5 + $0x57c] sm:$0xff]
    %v299 = vld [vmem:[#allocation5 + $0x584] sm:$0xf]
    %v300 = vld [vmem:[#allocation5 + $0x588] sm:$0xff]
    %v301 = vld [vmem:[#allocation5 + $0x590] sm:$0xf]
    %v302 = vld [vmem:[#allocation5 + $0x594] sm:$0xff]
    %v303 = vld [vmem:[#allocation5 + $0x59c] sm:$0xf]
    %v304 = vld [vmem:[#allocation5 + $0x5a0] sm:$0xff]
    %v305 = vld [vmem:[#allocation5 + $0x5a8] sm:$0xf]
    %v306 = vld [vmem:[#allocation5 + $0x5ac] sm:$0xff]
    %v307 = vld [vmem:[#allocation5 + $0x5b4] sm:$0xf]
    %v308 = vld [vmem:[#allocation5 + $0x5b8] sm:$0xff]
    %v309 = vld [vmem:[#allocation5 + $0x5c0] sm:$0xf]
    %v310 = vld [vmem:[#allocation5 + $0x5c4] sm:$0xff]
    %v311 = vld [vmem:[#allocation5 + $0x5cc] sm:$0xf]
    %v312 = vld [vmem:[#allocation5 + $0x5d0] sm:$0xff]
    %v313 = vld [vmem:[#allocation5 + $0x5d8] sm:$0xf]
    %v314 = vld [vmem:[#allocation5 + $0x5dc] sm:$0xff]
    %v315 = vld [vmem:[#allocation5 + $0x5e4] sm:$0xf]
    %v316 = vld [vmem:[#allocation5 + $0x5e8] sm:$0xff]
    %v317 = vld [vmem:[#allocation5 + $0x5f0] sm:$0xf]
    %v318 = vld [vmem:[#allocation5 + $0x5f4] sm:$0xff]
    %v319 = vld [vmem:[#allocation5 + $0x5fc] sm:$0xf]
    %v320 = vld [vmem:[%s2] sm:$0x7]
    %v322 = vlaneseq
    %v323 = vshrl.u32 %v322, 7
    %v324 = vsub.s32 0, %v323
    %v325 = vrot.slane %v320, %v324
    %v326 = vlaneseq
    %v327 = vshrl.u32 %v326, 7
    %v328 = vsub.s32 1, %v327
    %v329 = vrot.slane %v320, %v328
    %v330 = vlaneseq
    %v331 = vshrl.u32 %v330, 7
    %v332 = vsub.s32 2, %v331
    %v333 = vrot.slane %v320, %v332
    %v338 = vcombine.high %v63, %v63
    %v340 = vunpack.c.l.s4 1966171168
    %v341 = vunpack.c.0.s8 %v340
    %v342 = vlaneseq
    %v343 = vshrl.u32 %v342, 7
    %v344 = vsub.s32 %v341, %v343
    %v345 = vrot.slane %v63, %v344
    %v347 = vunpack.c.l.s4 1966171168
    %v348 = vunpack.c.0.s8 %v347
    %v349 = vlaneseq
    %v350 = vshrl.u32 %v349, 7
    %v351 = vsub.s32 %v348, %v350
    %v352 = vrot.slane %v338, %v351
    %v353 = vcombine.high %v345, %v345
    %v354 = vcombine.high %v352, %v352
    %v356 = vunpack.c.l.s4 1966171168
    %v357 = vunpack.c.0.s8 %v356
    %v358 = vlaneseq
    %v359 = vshrl.u32 %v358, 7
    %v360 = vsub.s32 %v357, %v359
    %v361 = vrot.slane %v345, %v360
    %v363 = vunpack.c.l.s4 1966171168
    %v364 = vunpack.c.0.s8 %v363
    %v365 = vlaneseq
    %v366 = vshrl.u32 %v365, 7
    %v367 = vsub.s32 %v364, %v366
    %v368 = vrot.slane %v352, %v367
    %v370 = vunpack.c.l.s4 1966171168
    %v371 = vunpack.c.0.s8 %v370
    %v372 = vlaneseq
    %v373 = vshrl.u32 %v372, 7
    %v374 = vsub.s32 %v371, %v373
    %v375 = vrot.slane %v353, %v374
    %v377 = vunpack.c.l.s4 1966171168
    %v378 = vunpack.c.0.s8 %v377
    %v379 = vlaneseq
    %v380 = vshrl.u32 %v379, 7
    %v381 = vsub.s32 %v378, %v380
    %v382 = vrot.slane %v354, %v381
    %v383 = vcombine.high %v361, %v361
    %v384 = vcombine.high %v368, %v368
    %v385 = vcombine.high %v375, %v375
    %v386 = vcombine.high %v382, %v382
    %v651 = vunpack.c.l.b16 %v64
    %v652 = vunpack.c.h.b16 %v64
    %v653 = vunpack.c.l.b16 %v65
    %v654 = vunpack.c.l.b16 %v66
    %v655 = vunpack.c.h.b16 %v66
    %v656 = vunpack.c.l.b16 %v67
    %v657 = vunpack.c.l.b16 %v68
    %v658 = vunpack.c.h.b16 %v68
    %v659 = vunpack.c.l.b16 %v69
    %v660 = vunpack.c.l.b16 %v70
    %v661 = vunpack.c.h.b16 %v70
    %v662 = vunpack.c.l.b16 %v71
    %v663 = vunpack.c.l.b16 %v72
    %v664 = vunpack.c.h.b16 %v72
    %v665 = vunpack.c.l.b16 %v73
    %v666 = vunpack.c.l.b16 %v74
    %v667 = vunpack.c.h.b16 %v74
    %v668 = vunpack.c.l.b16 %v75
    %v669 = vunpack.c.l.b16 %v76
    %v670 = vunpack.c.h.b16 %v76
    %v671 = vunpack.c.l.b16 %v77
    %v672 = vunpack.c.l.b16 %v78
    %v673 = vunpack.c.h.b16 %v78
    %v674 = vunpack.c.l.b16 %v79
    %v675 = vunpack.c.l.b16 %v80
    %v676 = vunpack.c.h.b16 %v80
    %v677 = vunpack.c.l.b16 %v81
    %v678 = vunpack.c.l.b16 %v82
    %v679 = vunpack.c.h.b16 %v82
    %v680 = vunpack.c.l.b16 %v83
    %v681 = vunpack.c.l.b16 %v84
    %v682 = vunpack.c.h.b16 %v84
    %v683 = vunpack.c.l.b16 %v85
    %v684 = vunpack.c.l.b16 %v86
    %v685 = vunpack.c.h.b16 %v86
    %v686 = vunpack.c.l.b16 %v87
    %v687 = vunpack.c.l.b16 %v88
    %v688 = vunpack.c.h.b16 %v88
    %v689 = vunpack.c.l.b16 %v89
    %v690 = vunpack.c.l.b16 %v90
    %v691 = vunpack.c.h.b16 %v90
    %v692 = vunpack.c.l.b16 %v91
    %v693 = vunpack.c.l.b16 %v92
    %v694 = vunpack.c.h.b16 %v92
    %v695 = vunpack.c.l.b16 %v93
    %v696 = vunpack.c.l.b16 %v94
    %v697 = vunpack.c.h.b16 %v94
    %v698 = vunpack.c.l.b16 %v95
    %v699 = vunpack.c.l.b16 %v96
    %v700 = vunpack.c.h.b16 %v96
    %v701 = vunpack.c.l.b16 %v97
    %v702 = vunpack.c.l.b16 %v98
    %v703 = vunpack.c.h.b16 %v98
    %v704 = vunpack.c.l.b16 %v99
    %v705 = vunpack.c.l.b16 %v100
    %v706 = vunpack.c.h.b16 %v100
    %v707 = vunpack.c.l.b16 %v101
    %v708 = vunpack.c.l.b16 %v102
    %v709 = vunpack.c.h.b16 %v102
    %v710 = vunpack.c.l.b16 %v103
    %v711 = vunpack.c.l.b16 %v104
    %v712 = vunpack.c.h.b16 %v104
    %v713 = vunpack.c.l.b16 %v105
    %v714 = vunpack.c.l.b16 %v106
    %v715 = vunpack.c.h.b16 %v106
    %v716 = vunpack.c.l.b16 %v107
    %v717 = vunpack.c.l.b16 %v108
    %v718 = vunpack.c.h.b16 %v108
    %v719 = vunpack.c.l.b16 %v109
    %v720 = vunpack.c.l.b16 %v110
    %v721 = vunpack.c.h.b16 %v110
    %v722 = vunpack.c.l.b16 %v111
    %v723 = vunpack.c.l.b16 %v112
    %v724 = vunpack.c.h.b16 %v112
    %v725 = vunpack.c.l.b16 %v113
    %v726 = vunpack.c.l.b16 %v114
    %v727 = vunpack.c.h.b16 %v114
    %v728 = vunpack.c.l.b16 %v115
    %v729 = vunpack.c.l.b16 %v116
    %v730 = vunpack.c.h.b16 %v116
    %v731 = vunpack.c.l.b16 %v117
    %v732 = vunpack.c.l.b16 %v118
    %v733 = vunpack.c.h.b16 %v118
    %v734 = vunpack.c.l.b16 %v119
    %v735 = vunpack.c.l.b16 %v120
    %v736 = vunpack.c.h.b16 %v120
    %v737 = vunpack.c.l.b16 %v121
    %v738 = vunpack.c.l.b16 %v122
    %v739 = vunpack.c.h.b16 %v122
    %v740 = vunpack.c.l.b16 %v123
    %v741 = vunpack.c.l.b16 %v124
    %v742 = vunpack.c.h.b16 %v124
    %v743 = vunpack.c.l.b16 %v125
    %v744 = vunpack.c.l.b16 %v126
    %v745 = vunpack.c.h.b16 %v126
    %v746 = vunpack.c.l.b16 %v127
    %v747 = vunpack.c.l.b16 %v128
    %v748 = vunpack.c.h.b16 %v128
    %v749 = vunpack.c.l.b16 %v129
    %v750 = vunpack.c.l.b16 %v130
    %v751 = vunpack.c.h.b16 %v130
    %v752 = vunpack.c.l.b16 %v131
    %v753 = vunpack.c.l.b16 %v132
    %v754 = vunpack.c.h.b16 %v132
    %v755 = vunpack.c.l.b16 %v133
    %v756 = vunpack.c.l.b16 %v134
    %v757 = vunpack.c.h.b16 %v134
    %v758 = vunpack.c.l.b16 %v135
    %v759 = vunpack.c.l.b16 %v136
    %v760 = vunpack.c.h.b16 %v136
    %v761 = vunpack.c.l.b16 %v137
    %v762 = vunpack.c.l.b16 %v138
    %v763 = vunpack.c.h.b16 %v138
    %v764 = vunpack.c.l.b16 %v139
    %v765 = vunpack.c.l.b16 %v140
    %v766 = vunpack.c.h.b16 %v140
    %v767 = vunpack.c.l.b16 %v141
    %v768 = vunpack.c.l.b16 %v142
    %v769 = vunpack.c.h.b16 %v142
    %v770 = vunpack.c.l.b16 %v143
    %v771 = vunpack.c.l.b16 %v144
    %v772 = vunpack.c.h.b16 %v144
    %v773 = vunpack.c.l.b16 %v145
    %v774 = vunpack.c.l.b16 %v146
    %v775 = vunpack.c.h.b16 %v146
    %v776 = vunpack.c.l.b16 %v147
    %v777 = vunpack.c.l.b16 %v148
    %v778 = vunpack.c.h.b16 %v148
    %v779 = vunpack.c.l.b16 %v149
    %v780 = vunpack.c.l.b16 %v150
    %v781 = vunpack.c.h.b16 %v150
    %v782 = vunpack.c.l.b16 %v151
    %v783 = vunpack.c.l.b16 %v152
    %v784 = vunpack.c.h.b16 %v152
    %v785 = vunpack.c.l.b16 %v153
    %v786 = vunpack.c.l.b16 %v154
    %v787 = vunpack.c.h.b16 %v154
    %v788 = vunpack.c.l.b16 %v155
    %v789 = vunpack.c.l.b16 %v156
    %v790 = vunpack.c.h.b16 %v156
    %v791 = vunpack.c.l.b16 %v157
    %v792 = vunpack.c.l.b16 %v158
    %v793 = vunpack.c.h.b16 %v158
    %v794 = vunpack.c.l.b16 %v159
    %v795 = vunpack.c.l.b16 %v160
    %v796 = vunpack.c.h.b16 %v160
    %v797 = vunpack.c.l.b16 %v161
    %v798 = vunpack.c.l.b16 %v162
    %v799 = vunpack.c.h.b16 %v162
    %v800 = vunpack.c.l.b16 %v163
    %v801 = vunpack.c.l.b16 %v164
    %v802 = vunpack.c.h.b16 %v164
    %v803 = vunpack.c.l.b16 %v165
    %v804 = vunpack.c.l.b16 %v166
    %v805 = vunpack.c.h.b16 %v166
    %v806 = vunpack.c.l.b16 %v167
    %v807 = vunpack.c.l.b16 %v168
    %v808 = vunpack.c.h.b16 %v168
    %v809 = vunpack.c.l.b16 %v169
    %v810 = vunpack.c.l.b16 %v170
    %v811 = vunpack.c.h.b16 %v170
    %v812 = vunpack.c.l.b16 %v171
    %v813 = vunpack.c.l.b16 %v172
    %v814 = vunpack.c.h.b16 %v172
    %v815 = vunpack.c.l.b16 %v173
    %v816 = vunpack.c.l.b16 %v174
    %v817 = vunpack.c.h.b16 %v174
    %v818 = vunpack.c.l.b16 %v175
    %v819 = vunpack.c.l.b16 %v176
    %v820 = vunpack.c.h.b16 %v176
    %v821 = vunpack.c.l.b16 %v177
    %v822 = vunpack.c.l.b16 %v178
    %v823 = vunpack.c.h.b16 %v178
    %v824 = vunpack.c.l.b16 %v179
    %v825 = vunpack.c.l.b16 %v180
    %v826 = vunpack.c.h.b16 %v180
    %v827 = vunpack.c.l.b16 %v181
    %v828 = vunpack.c.l.b16 %v182
    %v829 = vunpack.c.h.b16 %v182
    %v830 = vunpack.c.l.b16 %v183
    %v831 = vunpack.c.l.b16 %v184
    %v832 = vunpack.c.h.b16 %v184
    %v833 = vunpack.c.l.b16 %v185
    %v834 = vunpack.c.l.b16 %v186
    %v835 = vunpack.c.h.b16 %v186
    %v836 = vunpack.c.l.b16 %v187
    %v837 = vunpack.c.l.b16 %v188
    %v838 = vunpack.c.h.b16 %v188
    %v839 = vunpack.c.l.b16 %v189
    %v840 = vunpack.c.l.b16 %v190
    %v841 = vunpack.c.h.b16 %v190
    %v842 = vunpack.c.l.b16 %v191
    %v843 = vunpack.c.l.b16 %v192
    %v844 = vunpack.c.h.b16 %v192
    %v845 = vunpack.c.l.b16 %v193
    %v846 = vunpack.c.l.b16 %v194
    %v847 = vunpack.c.h.b16 %v194
    %v848 = vunpack.c.l.b16 %v195
    %v849 = vunpack.c.l.b16 %v196
    %v850 = vunpack.c.h.b16 %v196
    %v851 = vunpack.c.l.b16 %v197
    %v852 = vunpack.c.l.b16 %v198
    %v853 = vunpack.c.h.b16 %v198
    %v854 = vunpack.c.l.b16 %v199
    %v855 = vunpack.c.l.b16 %v200
    %v856 = vunpack.c.h.b16 %v200
    %v857 = vunpack.c.l.b16 %v201
    %v858 = vunpack.c.l.b16 %v202
    %v859 = vunpack.c.h.b16 %v202
    %v860 = vunpack.c.l.b16 %v203
    %v861 = vunpack.c.l.b16 %v204
    %v862 = vunpack.c.h.b16 %v204
    %v863 = vunpack.c.l.b16 %v205
    %v864 = vunpack.c.l.b16 %v206
    %v865 = vunpack.c.h.b16 %v206
    %v866 = vunpack.c.l.b16 %v207
    %v867 = vunpack.c.l.b16 %v208
    %v868 = vunpack.c.h.b16 %v208
    %v869 = vunpack.c.l.b16 %v209
    %v870 = vunpack.c.l.b16 %v210
    %v871 = vunpack.c.h.b16 %v210
    %v872 = vunpack.c.l.b16 %v211
    %v873 = vunpack.c.l.b16 %v212
    %v874 = vunpack.c.h.b16 %v212
    %v875 = vunpack.c.l.b16 %v213
    %v876 = vunpack.c.l.b16 %v214
    %v877 = vunpack.c.h.b16 %v214
    %v878 = vunpack.c.l.b16 %v215
    %v879 = vunpack.c.l.b16 %v216
    %v880 = vunpack.c.h.b16 %v216
    %v881 = vunpack.c.l.b16 %v217
    %v882 = vunpack.c.l.b16 %v218
    %v883 = vunpack.c.h.b16 %v218
    %v884 = vunpack.c.l.b16 %v219
    %v885 = vunpack.c.l.b16 %v220
    %v886 = vunpack.c.h.b16 %v220
    %v887 = vunpack.c.l.b16 %v221
    %v888 = vunpack.c.l.b16 %v222
    %v889 = vunpack.c.h.b16 %v222
    %v890 = vunpack.c.l.b16 %v223
    %v891 = vunpack.c.l.b16 %v224
    %v892 = vunpack.c.h.b16 %v224
    %v893 = vunpack.c.l.b16 %v225
    %v894 = vunpack.c.l.b16 %v226
    %v895 = vunpack.c.h.b16 %v226
    %v896 = vunpack.c.l.b16 %v227
    %v897 = vunpack.c.l.b16 %v228
    %v898 = vunpack.c.h.b16 %v228
    %v899 = vunpack.c.l.b16 %v229
    %v900 = vunpack.c.l.b16 %v230
    %v901 = vunpack.c.h.b16 %v230
    %v902 = vunpack.c.l.b16 %v231
    %v903 = vunpack.c.l.b16 %v232
    %v904 = vunpack.c.h.b16 %v232
    %v905 = vunpack.c.l.b16 %v233
    %v906 = vunpack.c.l.b16 %v234
    %v907 = vunpack.c.h.b16 %v234
    %v908 = vunpack.c.l.b16 %v235
    %v909 = vunpack.c.l.b16 %v236
    %v910 = vunpack.c.h.b16 %v236
    %v911 = vunpack.c.l.b16 %v237
    %v912 = vunpack.c.l.b16 %v238
    %v913 = vunpack.c.h.b16 %v238
    %v914 = vunpack.c.l.b16 %v239
    %v915 = vunpack.c.l.b16 %v240
    %v916 = vunpack.c.h.b16 %v240
    %v917 = vunpack.c.l.b16 %v241
    %v918 = vunpack.c.l.b16 %v242
    %v919 = vunpack.c.h.b16 %v242
    %v920 = vunpack.c.l.b16 %v243
    %v921 = vunpack.c.l.b16 %v244
    %v922 = vunpack.c.h.b16 %v244
    %v923 = vunpack.c.l.b16 %v245
    %v924 = vunpack.c.l.b16 %v246
    %v925 = vunpack.c.h.b16 %v246
    %v926 = vunpack.c.l.b16 %v247
    %v927 = vunpack.c.l.b16 %v248
    %v928 = vunpack.c.h.b16 %v248
    %v929 = vunpack.c.l.b16 %v249
    %v930 = vunpack.c.l.b16 %v250
    %v931 = vunpack.c.h.b16 %v250
    %v932 = vunpack.c.l.b16 %v251
    %v933 = vunpack.c.l.b16 %v252
    %v934 = vunpack.c.h.b16 %v252
    %v935 = vunpack.c.l.b16 %v253
    %v936 = vunpack.c.l.b16 %v254
    %v937 = vunpack.c.h.b16 %v254
    %v938 = vunpack.c.l.b16 %v255
    %v939 = vunpack.c.l.b16 %v256
    %v940 = vunpack.c.h.b16 %v256
    %v941 = vunpack.c.l.b16 %v257
    %v942 = vunpack.c.l.b16 %v258
    %v943 = vunpack.c.h.b16 %v258
    %v944 = vunpack.c.l.b16 %v259
    %v945 = vunpack.c.l.b16 %v260
    %v946 = vunpack.c.h.b16 %v260
    %v947 = vunpack.c.l.b16 %v261
    %v948 = vunpack.c.l.b16 %v262
    %v949 = vunpack.c.h.b16 %v262
    %v950 = vunpack.c.l.b16 %v263
    %v951 = vunpack.c.l.b16 %v264
    %v952 = vunpack.c.h.b16 %v264
    %v953 = vunpack.c.l.b16 %v265
    %v954 = vunpack.c.l.b16 %v266
    %v955 = vunpack.c.h.b16 %v266
    %v956 = vunpack.c.l.b16 %v267
    %v957 = vunpack.c.l.b16 %v268
    %v958 = vunpack.c.h.b16 %v268
    %v959 = vunpack.c.l.b16 %v269
    %v960 = vunpack.c.l.b16 %v270
    %v961 = vunpack.c.h.b16 %v270
    %v962 = vunpack.c.l.b16 %v271
    %v963 = vunpack.c.l.b16 %v272
    %v964 = vunpack.c.h.b16 %v272
    %v965 = vunpack.c.l.b16 %v273
    %v966 = vunpack.c.l.b16 %v274
    %v967 = vunpack.c.h.b16 %v274
    %v968 = vunpack.c.l.b16 %v275
    %v969 = vunpack.c.l.b16 %v276
    %v970 = vunpack.c.h.b16 %v276
    %v971 = vunpack.c.l.b16 %v277
    %v972 = vunpack.c.l.b16 %v278
    %v973 = vunpack.c.h.b16 %v278
    %v974 = vunpack.c.l.b16 %v279
    %v975 = vunpack.c.l.b16 %v280
    %v976 = vunpack.c.h.b16 %v280
    %v977 = vunpack.c.l.b16 %v281
    %v978 = vunpack.c.l.b16 %v282
    %v979 = vunpack.c.h.b16 %v282
    %v980 = vunpack.c.l.b16 %v283
    %v981 = vunpack.c.l.b16 %v284
    %v982 = vunpack.c.h.b16 %v284
    %v983 = vunpack.c.l.b16 %v285
    %v984 = vunpack.c.l.b16 %v286
    %v985 = vunpack.c.h.b16 %v286
    %v986 = vunpack.c.l.b16 %v287
    %v987 = vunpack.c.l.b16 %v288
    %v988 = vunpack.c.h.b16 %v288
    %v989 = vunpack.c.l.b16 %v289
    %v990 = vunpack.c.l.b16 %v290
    %v991 = vunpack.c.h.b16 %v290
    %v992 = vunpack.c.l.b16 %v291
    %v993 = vunpack.c.l.b16 %v292
    %v994 = vunpack.c.h.b16 %v292
    %v995 = vunpack.c.l.b16 %v293
    %v996 = vunpack.c.l.b16 %v294
    %v997 = vunpack.c.h.b16 %v294
    %v998 = vunpack.c.l.b16 %v295
    %v999 = vunpack.c.l.b16 %v296
    %v1000 = vunpack.c.h.b16 %v296
    %v1001 = vunpack.c.l.b16 %v297
    %v1002 = vunpack.c.l.b16 %v298
    %v1003 = vunpack.c.h.b16 %v298
    %v1004 = vunpack.c.l.b16 %v299
    %v1005 = vunpack.c.l.b16 %v300
    %v1006 = vunpack.c.h.b16 %v300
    %v1007 = vunpack.c.l.b16 %v301
    %v1008 = vunpack.c.l.b16 %v302
    %v1009 = vunpack.c.h.b16 %v302
    %v1010 = vunpack.c.l.b16 %v303
    %v1011 = vunpack.c.l.b16 %v304
    %v1012 = vunpack.c.h.b16 %v304
    %v1013 = vunpack.c.l.b16 %v305
    %v1014 = vunpack.c.l.b16 %v306
    %v1015 = vunpack.c.h.b16 %v306
    %v1016 = vunpack.c.l.b16 %v307
    %v1017 = vunpack.c.l.b16 %v308
    %v1018 = vunpack.c.h.b16 %v308
    %v1019 = vunpack.c.l.b16 %v309
    %v1020 = vunpack.c.l.b16 %v310
    %v1021 = vunpack.c.h.b16 %v310
    %v1022 = vunpack.c.l.b16 %v311
    %v1023 = vunpack.c.l.b16 %v312
    %v1024 = vunpack.c.h.b16 %v312
    %v1025 = vunpack.c.l.b16 %v313
    %v1026 = vunpack.c.l.b16 %v314
    %v1027 = vunpack.c.h.b16 %v314
    %v1028 = vunpack.c.l.b16 %v315
    %v1029 = vunpack.c.l.b16 %v316
    %v1030 = vunpack.c.h.b16 %v316
    %v1031 = vunpack.c.l.b16 %v317
    %v1032 = vunpack.c.l.b16 %v318
    %v1033 = vunpack.c.h.b16 %v318
    %v1034 = vunpack.c.l.b16 %v319
    %v1035 = vpack.c.b16 %v654, %v651
    %v1036 = vpack.c.b16 %v655, %v652
    %v1037 = vpack.c.b16 %v656, %v653
    %v1038 = vpack.c.b16 %v660, %v657
    %v1039 = vpack.c.b16 %v661, %v658
    %v1040 = vpack.c.b16 %v662, %v659
    %v1041 = vpack.c.b16 %v666, %v663
    %v1042 = vpack.c.b16 %v667, %v664
    %v1043 = vpack.c.b16 %v668, %v665
    %v1044 = vpack.c.b16 %v672, %v669
    %v1045 = vpack.c.b16 %v673, %v670
    %v1046 = vpack.c.b16 %v674, %v671
    %v1047 = vpack.c.b16 %v678, %v675
    %v1048 = vpack.c.b16 %v679, %v676
    %v1049 = vpack.c.b16 %v680, %v677
    %v1050 = vpack.c.b16 %v684, %v681
    %v1051 = vpack.c.b16 %v685, %v682
    %v1052 = vpack.c.b16 %v686, %v683
    %v1053 = vpack.c.b16 %v690, %v687
    %v1054 = vpack.c.b16 %v691, %v688
    %v1055 = vpack.c.b16 %v692, %v689
    %v1056 = vpack.c.b16 %v696, %v693
    %v1057 = vpack.c.b16 %v697, %v694
    %v1058 = vpack.c.b16 %v698, %v695
    %v1059 = vpack.c.b16 %v702, %v699
    %v1060 = vpack.c.b16 %v703, %v700
    %v1061 = vpack.c.b16 %v704, %v701
    %v1062 = vpack.c.b16 %v708, %v705
    %v1063 = vpack.c.b16 %v709, %v706
    %v1064 = vpack.c.b16 %v710, %v707
    %v1065 = vpack.c.b16 %v714, %v711
    %v1066 = vpack.c.b16 %v715, %v712
    %v1067 = vpack.c.b16 %v716, %v713
    %v1068 = vpack.c.b16 %v720, %v717
    %v1069 = vpack.c.b16 %v721, %v718
    %v1070 = vpack.c.b16 %v722, %v719
    %v1071 = vpack.c.b16 %v726, %v723
    %v1072 = vpack.c.b16 %v727, %v724
    %v1073 = vpack.c.b16 %v728, %v725
    %v1074 = vpack.c.b16 %v732, %v729
    %v1075 = vpack.c.b16 %v733, %v730
    %v1076 = vpack.c.b16 %v734, %v731
    %v1077 = vpack.c.b16 %v738, %v735
    %v1078 = vpack.c.b16 %v739, %v736
    %v1079 = vpack.c.b16 %v740, %v737
    %v1080 = vpack.c.b16 %v744, %v741
    %v1081 = vpack.c.b16 %v745, %v742
    %v1082 = vpack.c.b16 %v746, %v743
    %v1083 = vpack.c.b16 %v750, %v747
    %v1084 = vpack.c.b16 %v751, %v748
    %v1085 = vpack.c.b16 %v752, %v749
    %v1086 = vpack.c.b16 %v756, %v753
    %v1087 = vpack.c.b16 %v757, %v754
    %v1088 = vpack.c.b16 %v758, %v755
    %v1089 = vpack.c.b16 %v762, %v759
    %v1090 = vpack.c.b16 %v763, %v760
    %v1091 = vpack.c.b16 %v764, %v761
    %v1092 = vpack.c.b16 %v768, %v765
    %v1093 = vpack.c.b16 %v769, %v766
    %v1094 = vpack.c.b16 %v770, %v767
    %v1095 = vpack.c.b16 %v774, %v771
    %v1096 = vpack.c.b16 %v775, %v772
    %v1097 = vpack.c.b16 %v776, %v773
    %v1098 = vpack.c.b16 %v780, %v777
    %v1099 = vpack.c.b16 %v781, %v778
    %v1100 = vpack.c.b16 %v782, %v779
    %v1101 = vpack.c.b16 %v786, %v783
    %v1102 = vpack.c.b16 %v787, %v784
    %v1103 = vpack.c.b16 %v788, %v785
    %v1104 = vpack.c.b16 %v792, %v789
    %v1105 = vpack.c.b16 %v793, %v790
    %v1106 = vpack.c.b16 %v794, %v791
    %v1107 = vpack.c.b16 %v798, %v795
    %v1108 = vpack.c.b16 %v799, %v796
    %v1109 = vpack.c.b16 %v800, %v797
    %v1110 = vpack.c.b16 %v804, %v801
    %v1111 = vpack.c.b16 %v805, %v802
    %v1112 = vpack.c.b16 %v806, %v803
    %v1113 = vpack.c.b16 %v810, %v807
    %v1114 = vpack.c.b16 %v811, %v808
    %v1115 = vpack.c.b16 %v812, %v809
    %v1116 = vpack.c.b16 %v816, %v813
    %v1117 = vpack.c.b16 %v817, %v814
    %v1118 = vpack.c.b16 %v818, %v815
    %v1119 = vpack.c.b16 %v822, %v819
    %v1120 = vpack.c.b16 %v823, %v820
    %v1121 = vpack.c.b16 %v824, %v821
    %v1122 = vpack.c.b16 %v828, %v825
    %v1123 = vpack.c.b16 %v829, %v826
    %v1124 = vpack.c.b16 %v830, %v827
    %v1125 = vpack.c.b16 %v834, %v831
    %v1126 = vpack.c.b16 %v835, %v832
    %v1127 = vpack.c.b16 %v836, %v833
    %v1128 = vpack.c.b16 %v840, %v837
    %v1129 = vpack.c.b16 %v841, %v838
    %v1130 = vpack.c.b16 %v842, %v839
    %v1131 = vpack.c.b16 %v846, %v843
    %v1132 = vpack.c.b16 %v847, %v844
    %v1133 = vpack.c.b16 %v848, %v845
    %v1134 = vpack.c.b16 %v852, %v849
    %v1135 = vpack.c.b16 %v853, %v850
    %v1136 = vpack.c.b16 %v854, %v851
    %v1137 = vpack.c.b16 %v858, %v855
    %v1138 = vpack.c.b16 %v859, %v856
    %v1139 = vpack.c.b16 %v860, %v857
    %v1140 = vpack.c.b16 %v864, %v861
    %v1141 = vpack.c.b16 %v865, %v862
    %v1142 = vpack.c.b16 %v866, %v863
    %v1143 = vpack.c.b16 %v870, %v867
    %v1144 = vpack.c.b16 %v871, %v868
    %v1145 = vpack.c.b16 %v872, %v869
    %v1146 = vpack.c.b16 %v876, %v873
    %v1147 = vpack.c.b16 %v877, %v874
    %v1148 = vpack.c.b16 %v878, %v875
    %v1149 = vpack.c.b16 %v882, %v879
    %v1150 = vpack.c.b16 %v883, %v880
    %v1151 = vpack.c.b16 %v884, %v881
    %v1152 = vpack.c.b16 %v888, %v885
    %v1153 = vpack.c.b16 %v889, %v886
    %v1154 = vpack.c.b16 %v890, %v887
    %v1155 = vpack.c.b16 %v894, %v891
    %v1156 = vpack.c.b16 %v895, %v892
    %v1157 = vpack.c.b16 %v896, %v893
    %v1158 = vpack.c.b16 %v900, %v897
    %v1159 = vpack.c.b16 %v901, %v898
    %v1160 = vpack.c.b16 %v902, %v899
    %v1161 = vpack.c.b16 %v906, %v903
    %v1162 = vpack.c.b16 %v907, %v904
    %v1163 = vpack.c.b16 %v908, %v905
    %v1164 = vpack.c.b16 %v912, %v909
    %v1165 = vpack.c.b16 %v913, %v910
    %v1166 = vpack.c.b16 %v914, %v911
    %v1167 = vpack.c.b16 %v918, %v915
    %v1168 = vpack.c.b16 %v919, %v916
    %v1169 = vpack.c.b16 %v920, %v917
    %v1170 = vpack.c.b16 %v924, %v921
    %v1171 = vpack.c.b16 %v925, %v922
    %v1172 = vpack.c.b16 %v926, %v923
    %v1173 = vpack.c.b16 %v930, %v927
    %v1174 = vpack.c.b16 %v931, %v928
    %v1175 = vpack.c.b16 %v932, %v929
    %v1176 = vpack.c.b16 %v936, %v933
    %v1177 = vpack.c.b16 %v937, %v934
    %v1178 = vpack.c.b16 %v938, %v935
    %v1179 = vpack.c.b16 %v942, %v939
    %v1180 = vpack.c.b16 %v943, %v940
    %v1181 = vpack.c.b16 %v944, %v941
    %v1182 = vpack.c.b16 %v948, %v945
    %v1183 = vpack.c.b16 %v949, %v946
    %v1184 = vpack.c.b16 %v950, %v947
    %v1185 = vpack.c.b16 %v954, %v951
    %v1186 = vpack.c.b16 %v955, %v952
    %v1187 = vpack.c.b16 %v956, %v953
    %v1188 = vpack.c.b16 %v960, %v957
    %v1189 = vpack.c.b16 %v961, %v958
    %v1190 = vpack.c.b16 %v962, %v959
    %v1191 = vpack.c.b16 %v966, %v963
    %v1192 = vpack.c.b16 %v967, %v964
    %v1193 = vpack.c.b16 %v968, %v965
    %v1194 = vpack.c.b16 %v972, %v969
    %v1195 = vpack.c.b16 %v973, %v970
    %v1196 = vpack.c.b16 %v974, %v971
    %v1197 = vpack.c.b16 %v978, %v975
    %v1198 = vpack.c.b16 %v979, %v976
    %v1199 = vpack.c.b16 %v980, %v977
    %v1200 = vpack.c.b16 %v984, %v981
    %v1201 = vpack.c.b16 %v985, %v982
    %v1202 = vpack.c.b16 %v986, %v983
    %v1203 = vpack.c.b16 %v990, %v987
    %v1204 = vpack.c.b16 %v991, %v988
    %v1205 = vpack.c.b16 %v992, %v989
    %v1206 = vpack.c.b16 %v996, %v993
    %v1207 = vpack.c.b16 %v997, %v994
    %v1208 = vpack.c.b16 %v998, %v995
    %v1209 = vpack.c.b16 %v1002, %v999
    %v1210 = vpack.c.b16 %v1003, %v1000
    %v1211 = vpack.c.b16 %v1004, %v1001
    %v1212 = vpack.c.b16 %v1008, %v1005
    %v1213 = vpack.c.b16 %v1009, %v1006
    %v1214 = vpack.c.b16 %v1010, %v1007
    %v1215 = vpack.c.b16 %v1014, %v1011
    %v1216 = vpack.c.b16 %v1015, %v1012
    %v1217 = vpack.c.b16 %v1016, %v1013
    %v1218 = vpack.c.b16 %v1020, %v1017
    %v1219 = vpack.c.b16 %v1021, %v1018
    %v1220 = vpack.c.b16 %v1022, %v1019
    %v1221 = vpack.c.b16 %v1026, %v1023
    %v1222 = vpack.c.b16 %v1027, %v1024
    %v1223 = vpack.c.b16 %v1028, %v1025
    %v1224 = vpack.c.b16 %v1032, %v1029
    %v1225 = vpack.c.b16 %v1033, %v1030
    %v1226 = vpack.c.b16 %v1034, %v1031
    %1419 = vmatprep.subr.bf16.mxu0 %v1036
    %1420 = vmatpush1.bf16.msra.mxu0 %v1035
    %1421 = vmatprep.subr.bf16.mxu0 %v1039
    %1422 = vmatpush1.bf16.msra.mxu0 %v1038
    %1423 = vmatprep.subr.bf16.mxu0 %v1042
    %1424 = vmatpush1.bf16.msra.mxu0 %v1041
    %1425 = vmatprep.subr.bf16.mxu0 %v1045
    %1426 = vmatpush1.bf16.msra.mxu0 %v1044
    %1427 = vmatprep.subr.bf16.mxu0 %v1048
    %1428 = vmatpush1.bf16.msra.mxu0 %v1047
    %1429 = vmatprep.subr.bf16.mxu0 %v1051
    %1430 = vmatpush1.bf16.msra.mxu0 %v1050
    %1431 = vmatprep.subr.bf16.mxu0 %v1054
    %1432 = vmatpush1.bf16.msra.mxu0 %v1053
    %1433 = vmatprep.subr.bf16.mxu0 %v1057
    %1434 = vmatpush1.bf16.msra.mxu0 %v1056
    %1435 = vmatprep.subr.bf16.mxu0 %v1060
    %1436 = vmatpush1.bf16.msra.mxu0 %v1059
    %1437 = vmatprep.subr.bf16.mxu0 %v1063
    %1438 = vmatpush1.bf16.msra.mxu0 %v1062
    %1439 = vmatprep.subr.bf16.mxu0 %v1066
    %1440 = vmatpush1.bf16.msra.mxu0 %v1065
    %1441 = vmatprep.subr.bf16.mxu0 %v1069
    %1442 = vmatpush1.bf16.msra.mxu0 %v1068
    %1443 = vmatprep.subr.bf16.mxu0 %v1072
    %1444 = vmatpush1.bf16.msra.mxu0 %v1071
    %1445 = vmatprep.subr.bf16.mxu0 %v1075
    %1446 = vmatpush1.bf16.msra.mxu0 %v1074
    %1447 = vmatprep.subr.bf16.mxu0 %v1078
    %1448 = vmatpush1.bf16.msra.mxu0 %v1077
    %1449 = vmatprep.subr.bf16.mxu0 %v1081
    %1450 = vmatpush1.bf16.msra.mxu0 %v1080
    %1451 = vmatprep.mubr.bf16.mxu0 %v375
    %1452 = vmatmul.mubr.bf16.gmra.mrb[0].mxu0 %v361
    %v1453 = vpop.f32.mrb[0].mxu0
    %v1454 = vadd.f32 %v325, %v1453
    %v1455 = vpop.f32.mrb[0].mxu0
    %v1456 = vadd.f32 %v329, %v1455
    %v1457 = vpop.f32.mrb[0].mxu0
    %v1458 = vpop.f32.mrb[0].mxu0
    %1459 = vdwg.mxu0
    %1460 = vmatprep.subr.bf16.mxu0 %v1084
    %1461 = vmatpush1.bf16.msra.mxu0 %v1083
    %1462 = vmatprep.subr.bf16.mxu0 %v1087
    %1463 = vmatpush1.bf16.msra.mxu0 %v1086
    %1464 = vmatprep.subr.bf16.mxu0 %v1090
    %1465 = vmatpush1.bf16.msra.mxu0 %v1089
    %1466 = vmatprep.subr.bf16.mxu0 %v1093
    %1467 = vmatpush1.bf16.msra.mxu0 %v1092
    %1468 = vmatprep.subr.bf16.mxu0 %v1096
    %1469 = vmatpush1.bf16.msra.mxu0 %v1095
    %1470 = vmatprep.subr.bf16.mxu0 %v1099
    %1471 = vmatpush1.bf16.msra.mxu0 %v1098
    %1472 = vmatprep.subr.bf16.mxu0 %v1102
    %1473 = vmatpush1.bf16.msra.mxu0 %v1101
    %1474 = vmatprep.subr.bf16.mxu0 %v1105
    %1475 = vmatpush1.bf16.msra.mxu0 %v1104
    %1476 = vmatprep.subr.bf16.mxu0 %v1108
    %1477 = vmatpush1.bf16.msra.mxu0 %v1107
    %1478 = vmatprep.subr.bf16.mxu0 %v1111
    %1479 = vmatpush1.bf16.msra.mxu0 %v1110
    %1480 = vmatprep.subr.bf16.mxu0 %v1114
    %1481 = vmatpush1.bf16.msra.mxu0 %v1113
    %1482 = vmatprep.subr.bf16.mxu0 %v1117
    %1483 = vmatpush1.bf16.msra.mxu0 %v1116
    %1484 = vmatprep.subr.bf16.mxu0 %v1120
    %1485 = vmatpush1.bf16.msra.mxu0 %v1119
    %1486 = vmatprep.subr.bf16.mxu0 %v1123
    %1487 = vmatpush1.bf16.msra.mxu0 %v1122
    %1488 = vmatprep.subr.bf16.mxu0 %v1126
    %1489 = vmatpush1.bf16.msra.mxu0 %v1125
    %1490 = vmatprep.subr.bf16.mxu0 %v1129
    %1491 = vmatpush1.bf16.msra.mxu0 %v1128
    %1492 = vmatprep.mubr.bf16.mxu0 %v385
    %1493 = vmatmul.mubr.bf16.gmra.mrb[0].mxu0 %v383
    %v1494 = vpop.f32.mrb[0].mxu0
    %v1495 = vadd.f32 %v1454, %v1494
    %v1496 = vpop.f32.mrb[0].mxu0
    %v1497 = vadd.f32 %v1456, %v1496
    %v1498 = vpop.f32.mrb[0].mxu0
    %v1499 = vpop.f32.mrb[0].mxu0
    %1500 = vdwg.mxu0
    %1501 = vmatprep.subr.bf16.mxu0 %v1132
    %1502 = vmatpush1.bf16.msra.mxu0 %v1131
    %1503 = vmatprep.subr.bf16.mxu0 %v1135
    %1504 = vmatpush1.bf16.msra.mxu0 %v1134
    %1505 = vmatprep.subr.bf16.mxu0 %v1138
    %1506 = vmatpush1.bf16.msra.mxu0 %v1137
    %1507 = vmatprep.subr.bf16.mxu0 %v1141
    %1508 = vmatpush1.bf16.msra.mxu0 %v1140
    %1509 = vmatprep.subr.bf16.mxu0 %v1144
    %1510 = vmatpush1.bf16.msra.mxu0 %v1143
    %1511 = vmatprep.subr.bf16.mxu0 %v1147
    %1512 = vmatpush1.bf16.msra.mxu0 %v1146
    %1513 = vmatprep.subr.bf16.mxu0 %v1150
    %1514 = vmatpush1.bf16.msra.mxu0 %v1149
    %1515 = vmatprep.subr.bf16.mxu0 %v1153
    %1516 = vmatpush1.bf16.msra.mxu0 %v1152
    %1517 = vmatprep.subr.bf16.mxu0 %v1156
    %1518 = vmatpush1.bf16.msra.mxu0 %v1155
    %1519 = vmatprep.subr.bf16.mxu0 %v1159
    %1520 = vmatpush1.bf16.msra.mxu0 %v1158
    %1521 = vmatprep.subr.bf16.mxu0 %v1162
    %1522 = vmatpush1.bf16.msra.mxu0 %v1161
    %1523 = vmatprep.subr.bf16.mxu0 %v1165
    %1524 = vmatpush1.bf16.msra.mxu0 %v1164
    %1525 = vmatprep.subr.bf16.mxu0 %v1168
    %1526 = vmatpush1.bf16.msra.mxu0 %v1167
    %1527 = vmatprep.subr.bf16.mxu0 %v1171
    %1528 = vmatpush1.bf16.msra.mxu0 %v1170
    %1529 = vmatprep.subr.bf16.mxu0 %v1174
    %1530 = vmatpush1.bf16.msra.mxu0 %v1173
    %1531 = vmatprep.subr.bf16.mxu0 %v1177
    %1532 = vmatpush1.bf16.msra.mxu0 %v1176
    %1533 = vmatprep.mubr.bf16.mxu0 %v382
    %1534 = vmatmul.mubr.bf16.gmra.mrb[0].mxu0 %v368
    %v1535 = vpop.f32.mrb[0].mxu0
    %v1536 = vadd.f32 %v1495, %v1535
    %v1537 = vpop.f32.mrb[0].mxu0
    %v1538 = vadd.f32 %v1497, %v1537
    %v1539 = vpop.f32.mrb[0].mxu0
    %v1540 = vpop.f32.mrb[0].mxu0
    %1541 = vdwg.mxu0
    %1542 = vmatprep.subr.bf16.mxu0 %v1180
    %1543 = vmatpush1.bf16.msra.mxu0 %v1179
    %1544 = vmatprep.subr.bf16.mxu0 %v1183
    %1545 = vmatpush1.bf16.msra.mxu0 %v1182
    %1546 = vmatprep.subr.bf16.mxu0 %v1186
    %1547 = vmatpush1.bf16.msra.mxu0 %v1185
    %1548 = vmatprep.subr.bf16.mxu0 %v1189
    %1549 = vmatpush1.bf16.msra.mxu0 %v1188
    %1550 = vmatprep.subr.bf16.mxu0 %v1192
    %1551 = vmatpush1.bf16.msra.mxu0 %v1191
    %1552 = vmatprep.subr.bf16.mxu0 %v1195
    %1553 = vmatpush1.bf16.msra.mxu0 %v1194
    %1554 = vmatprep.subr.bf16.mxu0 %v1198
    %1555 = vmatpush1.bf16.msra.mxu0 %v1197
    %1556 = vmatprep.subr.bf16.mxu0 %v1201
    %1557 = vmatpush1.bf16.msra.mxu0 %v1200
    %1558 = vmatprep.subr.bf16.mxu0 %v1204
    %1559 = vmatpush1.bf16.msra.mxu0 %v1203
    %1560 = vmatprep.subr.bf16.mxu0 %v1207
    %1561 = vmatpush1.bf16.msra.mxu0 %v1206
    %1562 = vmatprep.subr.bf16.mxu0 %v1210
    %1563 = vmatpush1.bf16.msra.mxu0 %v1209
    %1564 = vmatprep.subr.bf16.mxu0 %v1213
    %1565 = vmatpush1.bf16.msra.mxu0 %v1212
    %1566 = vmatprep.subr.bf16.mxu0 %v1216
    %1567 = vmatpush1.bf16.msra.mxu0 %v1215
    %1568 = vmatprep.subr.bf16.mxu0 %v1219
    %1569 = vmatpush1.bf16.msra.mxu0 %v1218
    %1570 = vmatprep.subr.bf16.mxu0 %v1222
    %1571 = vmatpush1.bf16.msra.mxu0 %v1221
    %1572 = vmatprep.subr.bf16.mxu0 %v1225
    %1573 = vmatpush1.bf16.msra.mxu0 %v1224
    %1574 = vmatprep.mubr.bf16.mxu0 %v386
    %1575 = vmatmul.mubr.bf16.gmra.mrb[0].mxu0 %v384
    %v1576 = vpop.f32.mrb[0].mxu0
    %v1577 = vadd.f32 %v1536, %v1576
    %v1578 = vpop.f32.mrb[0].mxu0
    %v1579 = vadd.f32 %v1538, %v1578
    %v1580 = vpop.f32.mrb[0].mxu0
    %v1581 = vpop.f32.mrb[0].mxu0
    %1582 = vdwg.mxu0
    %1583 = vmatprep.subr.bf16.mxu0 0
    %1584 = vmatpush1.bf16.msra.mxu0 %v1037
    %1585 = vmatprep.subr.bf16.mxu0 0
    %1586 = vmatpush1.bf16.msra.mxu0 %v1040
    %1587 = vmatprep.subr.bf16.mxu0 0
    %1588 = vmatpush1.bf16.msra.mxu0 %v1043
    %1589 = vmatprep.subr.bf16.mxu0 0
    %1590 = vmatpush1.bf16.msra.mxu0 %v1046
    %1591 = vmatprep.subr.bf16.mxu0 0
    %1592 = vmatpush1.bf16.msra.mxu0 %v1049
    %1593 = vmatprep.subr.bf16.mxu0 0
    %1594 = vmatpush1.bf16.msra.mxu0 %v1052
    %1595 = vmatprep.subr.bf16.mxu0 0
    %1596 = vmatpush1.bf16.msra.mxu0 %v1055
    %1597 = vmatprep.subr.bf16.mxu0 0
    %1598 = vmatpush1.bf16.msra.mxu0 %v1058
    %1599 = vmatprep.subr.bf16.mxu0 0
    %1600 = vmatpush1.bf16.msra.mxu0 %v1061
    %1601 = vmatprep.subr.bf16.mxu0 0
    %1602 = vmatpush1.bf16.msra.mxu0 %v1064
    %1603 = vmatprep.subr.bf16.mxu0 0
    %1604 = vmatpush1.bf16.msra.mxu0 %v1067
    %1605 = vmatprep.subr.bf16.mxu0 0
    %1606 = vmatpush1.bf16.msra.mxu0 %v1070
    %1607 = vmatprep.subr.bf16.mxu0 0
    %1608 = vmatpush1.bf16.msra.mxu0 %v1073
    %1609 = vmatprep.subr.bf16.mxu0 0
    %1610 = vmatpush1.bf16.msra.mxu0 %v1076
    %1611 = vmatprep.subr.bf16.mxu0 0
    %1612 = vmatpush1.bf16.msra.mxu0 %v1079
    %1613 = vmatprep.subr.bf16.mxu0 0
    %1614 = vmatpush1.bf16.msra.mxu0 %v1082
    %1615 = vmatprep.mubr.bf16.mxu0 %v375
    %1616 = vmatmul.mubr.bf16.gmra.mrb[0].mxu0 %v361
    %v1617 = vpop.f32.mrb[0].mxu0
    %v1618 = vadd.f32 %v333, %v1617
    %v1619 = vpop.f32.mrb[0].mxu0
    %v1620 = vpop.f32.mrb[0].mxu0
    %v1621 = vpop.f32.mrb[0].mxu0
    %1622 = vdwg.mxu0
    %1623 = vmatprep.subr.bf16.mxu0 0
    %1624 = vmatpush1.bf16.msra.mxu0 %v1085
    %1625 = vmatprep.subr.bf16.mxu0 0
    %1626 = vmatpush1.bf16.msra.mxu0 %v1088
    %1627 = vmatprep.subr.bf16.mxu0 0
    %1628 = vmatpush1.bf16.msra.mxu0 %v1091
    %1629 = vmatprep.subr.bf16.mxu0 0
    %1630 = vmatpush1.bf16.msra.mxu0 %v1094
    %1631 = vmatprep.subr.bf16.mxu0 0
    %1632 = vmatpush1.bf16.msra.mxu0 %v1097
    %1633 = vmatprep.subr.bf16.mxu0 0
    %1634 = vmatpush1.bf16.msra.mxu0 %v1100
    %1635 = vmatprep.subr.bf16.mxu0 0
    %1636 = vmatpush1.bf16.msra.mxu0 %v1103
    %1637 = vmatprep.subr.bf16.mxu0 0
    %1638 = vmatpush1.bf16.msra.mxu0 %v1106
    %1639 = vmatprep.subr.bf16.mxu0 0
    %1640 = vmatpush1.bf16.msra.mxu0 %v1109
    %1641 = vmatprep.subr.bf16.mxu0 0
    %1642 = vmatpush1.bf16.msra.mxu0 %v1112
    %1643 = vmatprep.subr.bf16.mxu0 0
    %1644 = vmatpush1.bf16.msra.mxu0 %v1115
    %1645 = vmatprep.subr.bf16.mxu0 0
    %1646 = vmatpush1.bf16.msra.mxu0 %v1118
    %1647 = vmatprep.subr.bf16.mxu0 0
    %1648 = vmatpush1.bf16.msra.mxu0 %v1121
    %1649 = vmatprep.subr.bf16.mxu0 0
    %1650 = vmatpush1.bf16.msra.mxu0 %v1124
    %1651 = vmatprep.subr.bf16.mxu0 0
    %1652 = vmatpush1.bf16.msra.mxu0 %v1127
    %1653 = vmatprep.subr.bf16.mxu0 0
    %1654 = vmatpush1.bf16.msra.mxu0 %v1130
    %1655 = vmatprep.mubr.bf16.mxu0 %v385
    %1656 = vmatmul.mubr.bf16.gmra.mrb[0].mxu0 %v383
    %v1657 = vpop.f32.mrb[0].mxu0
    %v1658 = vadd.f32 %v1618, %v1657
    %v1659 = vpop.f32.mrb[0].mxu0
    %v1660 = vpop.f32.mrb[0].mxu0
    %v1661 = vpop.f32.mrb[0].mxu0
    %1662 = vdwg.mxu0
    %1663 = vmatprep.subr.bf16.mxu0 0
    %1664 = vmatpush1.bf16.msra.mxu0 %v1133
    %1665 = vmatprep.subr.bf16.mxu0 0
    %1666 = vmatpush1.bf16.msra.mxu0 %v1136
    %1667 = vmatprep.subr.bf16.mxu0 0
    %1668 = vmatpush1.bf16.msra.mxu0 %v1139
    %1669 = vmatprep.subr.bf16.mxu0 0
    %1670 = vmatpush1.bf16.msra.mxu0 %v1142
    %1671 = vmatprep.subr.bf16.mxu0 0
    %1672 = vmatpush1.bf16.msra.mxu0 %v1145
    %1673 = vmatprep.subr.bf16.mxu0 0
    %1674 = vmatpush1.bf16.msra.mxu0 %v1148
    %1675 = vmatprep.subr.bf16.mxu0 0
    %1676 = vmatpush1.bf16.msra.mxu0 %v1151
    %1677 = vmatprep.subr.bf16.mxu0 0
    %1678 = vmatpush1.bf16.msra.mxu0 %v1154
    %1679 = vmatprep.subr.bf16.mxu0 0
    %1680 = vmatpush1.bf16.msra.mxu0 %v1157
    %1681 = vmatprep.subr.bf16.mxu0 0
    %1682 = vmatpush1.bf16.msra.mxu0 %v1160
    %1683 = vmatprep.subr.bf16.mxu0 0
    %1684 = vmatpush1.bf16.msra.mxu0 %v1163
    %1685 = vmatprep.subr.bf16.mxu0 0
    %1686 = vmatpush1.bf16.msra.mxu0 %v1166
    %1687 = vmatprep.subr.bf16.mxu0 0
    %1688 = vmatpush1.bf16.msra.mxu0 %v1169
    %1689 = vmatprep.subr.bf16.mxu0 0
    %1690 = vmatpush1.bf16.msra.mxu0 %v1172
    %1691 = vmatprep.subr.bf16.mxu0 0
    %1692 = vmatpush1.bf16.msra.mxu0 %v1175
    %1693 = vmatprep.subr.bf16.mxu0 0
    %1694 = vmatpush1.bf16.msra.mxu0 %v1178
    %1695 = vmatprep.mubr.bf16.mxu0 %v382
    %1696 = vmatmul.mubr.bf16.gmra.mrb[0].mxu0 %v368
    %v1697 = vpop.f32.mrb[0].mxu0
    %v1698 = vadd.f32 %v1658, %v1697
    %v1699 = vpop.f32.mrb[0].mxu0
    %v1700 = vpop.f32.mrb[0].mxu0
    %v1701 = vpop.f32.mrb[0].mxu0
    %1702 = vdwg.mxu0
    %1703 = vmatprep.subr.bf16.mxu0 0
    %1704 = vmatpush1.bf16.msra.mxu0 %v1181
    %1705 = vmatprep.subr.bf16.mxu0 0
    %1706 = vmatpush1.bf16.msra.mxu0 %v1184
    %1707 = vmatprep.subr.bf16.mxu0 0
    %1708 = vmatpush1.bf16.msra.mxu0 %v1187
    %1709 = vmatprep.subr.bf16.mxu0 0
    %1710 = vmatpush1.bf16.msra.mxu0 %v1190
    %1711 = vmatprep.subr.bf16.mxu0 0
    %1712 = vmatpush1.bf16.msra.mxu0 %v1193
    %1713 = vmatprep.subr.bf16.mxu0 0
    %1714 = vmatpush1.bf16.msra.mxu0 %v1196
    %1715 = vmatprep.subr.bf16.mxu0 0
    %1716 = vmatpush1.bf16.msra.mxu0 %v1199
    %1717 = vmatprep.subr.bf16.mxu0 0
    %1718 = vmatpush1.bf16.msra.mxu0 %v1202
    %1719 = vmatprep.subr.bf16.mxu0 0
    %1720 = vmatpush1.bf16.msra.mxu0 %v1205
    %1721 = vmatprep.subr.bf16.mxu0 0
    %1722 = vmatpush1.bf16.msra.mxu0 %v1208
    %1723 = vmatprep.subr.bf16.mxu0 0
    %1724 = vmatpush1.bf16.msra.mxu0 %v1211
    %1725 = vmatprep.subr.bf16.mxu0 0
    %1726 = vmatpush1.bf16.msra.mxu0 %v1214
    %1727 = vmatprep.subr.bf16.mxu0 0
    %1728 = vmatpush1.bf16.msra.mxu0 %v1217
    %1729 = vmatprep.subr.bf16.mxu0 0
    %1730 = vmatpush1.bf16.msra.mxu0 %v1220
    %1731 = vmatprep.subr.bf16.mxu0 0
    %1732 = vmatpush1.bf16.msra.mxu0 %v1223
    %1733 = vmatprep.subr.bf16.mxu0 0
    %1734 = vmatpush1.bf16.msra.mxu0 %v1226
    %1735 = vmatprep.mubr.bf16.mxu0 %v386
    %1736 = vmatmul.mubr.bf16.gmra.mrb[0].mxu0 %v384
    %v1737 = vpop.f32.mrb[0].mxu0
    %v1738 = vadd.f32 %v1698, %v1737
    %v1739 = vpop.f32.mrb[0].mxu0
    %v1740 = vpop.f32.mrb[0].mxu0
    %v1741 = vpop.f32.mrb[0].mxu0
    %1742 = vdwg.mxu0
    %vm1743 = vcmp.ge.f32.partialorder %v1577, 0.0
    %vm1744 = vcmp.ge.f32.partialorder %v1579, 0.0
    %vm1745 = vcmp.ge.f32.partialorder %v1738, 0.0
    %v1746 = vmul.f32 %v1577, 0.01
    %v1747 = vmul.f32 %v1579, 0.01
    %v1748 = vmul.f32 %v1738, 0.01
    %v1749 = vsel %vm1743, %v1577, %v1746
    %v1750 = vsel %vm1744, %v1579, %v1747
    %v1751 = vsel %vm1745, %v1738, %v1748
    %v1752 = vld [vmem:[#allocation8] sm:$0x3]
    %v1753 = vpack.c.bf16 %v1749, %v1749
    %v1754 = vpack.c.bf16 %v1750, %v1750
    %v1755 = vpack.c.bf16 %v1751, %v1751
    %v1756 = vld [vmem:[#allocation7] sm:$0xf]
    %v1757 = vld [vmem:[#allocation7 + $0x4] sm:$0xf]
    %v1758 = vld [vmem:[#allocation7 + $0x8] sm:$0xf]
    %v1759 = vld [vmem:[#allocation7 + $0xc] sm:$0xf]
    %v1760 = vld [vmem:[#allocation7 + $0x10] sm:$0xf]
    %v1761 = vld [vmem:[#allocation7 + $0x14] sm:$0xf]
    %v1762 = vld [vmem:[#allocation7 + $0x18] sm:$0xf]
    %v1763 = vld [vmem:[#allocation7 + $0x1c] sm:$0xf]
    %v1764 = vld [vmem:[#allocation7 + $0x20] sm:$0xf]
    %v1765 = vld [vmem:[#allocation7 + $0x24] sm:$0xf]
    %v1766 = vld [vmem:[#allocation7 + $0x28] sm:$0xf]
    %v1767 = vld [vmem:[#allocation7 + $0x2c] sm:$0xf]
    %v1768 = vld [vmem:[#allocation7 + $0x30] sm:$0xf]
    %v1769 = vld [vmem:[#allocation7 + $0x34] sm:$0xf]
    %v1770 = vld [vmem:[#allocation7 + $0x38] sm:$0xf]
    %v1771 = vld [vmem:[#allocation7 + $0x3c] sm:$0xf]
    %v1772 = vld [vmem:[#allocation7 + $0x40] sm:$0xf]
    %v1773 = vld [vmem:[#allocation7 + $0x44] sm:$0xf]
    %v1774 = vld [vmem:[#allocation7 + $0x48] sm:$0xf]
    %v1775 = vld [vmem:[#allocation7 + $0x4c] sm:$0xf]
    %v1776 = vld [vmem:[#allocation7 + $0x50] sm:$0xf]
    %v1777 = vld [vmem:[#allocation7 + $0x54] sm:$0xf]
    %v1778 = vld [vmem:[#allocation7 + $0x58] sm:$0xf]
    %v1779 = vld [vmem:[#allocation7 + $0x5c] sm:$0xf]
    %v1780 = vld [vmem:[#allocation7 + $0x60] sm:$0xf]
    %v1781 = vld [vmem:[#allocation7 + $0x64] sm:$0xf]
    %v1782 = vld [vmem:[#allocation7 + $0x68] sm:$0xf]
    %v1783 = vld [vmem:[#allocation7 + $0x6c] sm:$0xf]
    %v1784 = vld [vmem:[#allocation7 + $0x70] sm:$0xf]
    %v1785 = vld [vmem:[#allocation7 + $0x74] sm:$0xf]
    %v1786 = vld [vmem:[#allocation7 + $0x78] sm:$0xf]
    %v1787 = vld [vmem:[#allocation7 + $0x7c] sm:$0xf]
    %v1788 = vld [vmem:[#allocation7 + $0x80] sm:$0xf]
    %v1789 = vld [vmem:[#allocation7 + $0x84] sm:$0xf]
    %v1790 = vld [vmem:[#allocation7 + $0x88] sm:$0xf]
    %v1791 = vld [vmem:[#allocation7 + $0x8c] sm:$0xf]
    %v1792 = vld [vmem:[#allocation7 + $0x90] sm:$0xf]
    %v1793 = vld [vmem:[#allocation7 + $0x94] sm:$0xf]
    %v1794 = vld [vmem:[#allocation7 + $0x98] sm:$0xf]
    %v1795 = vld [vmem:[#allocation7 + $0x9c] sm:$0xf]
    %v1796 = vld [vmem:[#allocation7 + $0xa0] sm:$0xf]
    %v1797 = vld [vmem:[#allocation7 + $0xa4] sm:$0xf]
    %v1798 = vld [vmem:[#allocation7 + $0xa8] sm:$0xf]
    %v1799 = vld [vmem:[#allocation7 + $0xac] sm:$0xf]
    %v1800 = vld [vmem:[#allocation7 + $0xb0] sm:$0xf]
    %v1801 = vld [vmem:[#allocation7 + $0xb4] sm:$0xf]
    %v1802 = vld [vmem:[#allocation7 + $0xb8] sm:$0xf]
    %v1803 = vld [vmem:[#allocation7 + $0xbc] sm:$0xf]
    %v1852 = vunpack.c.l.b16 %v1756
    %v1853 = vunpack.c.l.b16 %v1757
    %v1854 = vunpack.c.l.b16 %v1758
    %v1855 = vunpack.c.l.b16 %v1759
    %v1856 = vunpack.c.l.b16 %v1760
    %v1857 = vunpack.c.l.b16 %v1761
    %v1858 = vunpack.c.l.b16 %v1762
    %v1859 = vunpack.c.l.b16 %v1763
    %v1860 = vunpack.c.l.b16 %v1764
    %v1861 = vunpack.c.l.b16 %v1765
    %v1862 = vunpack.c.l.b16 %v1766
    %v1863 = vunpack.c.l.b16 %v1767
    %v1864 = vunpack.c.l.b16 %v1768
    %v1865 = vunpack.c.l.b16 %v1769
    %v1866 = vunpack.c.l.b16 %v1770
    %v1867 = vunpack.c.l.b16 %v1771
    %v1868 = vunpack.c.l.b16 %v1772
    %v1869 = vunpack.c.l.b16 %v1773
    %v1870 = vunpack.c.l.b16 %v1774
    %v1871 = vunpack.c.l.b16 %v1775
    %v1872 = vunpack.c.l.b16 %v1776
    %v1873 = vunpack.c.l.b16 %v1777
    %v1874 = vunpack.c.l.b16 %v1778
    %v1875 = vunpack.c.l.b16 %v1779
    %v1876 = vunpack.c.l.b16 %v1780
    %v1877 = vunpack.c.l.b16 %v1781
    %v1878 = vunpack.c.l.b16 %v1782
    %v1879 = vunpack.c.l.b16 %v1783
    %v1880 = vunpack.c.l.b16 %v1784
    %v1881 = vunpack.c.l.b16 %v1785
    %v1882 = vunpack.c.l.b16 %v1786
    %v1883 = vunpack.c.l.b16 %v1787
    %v1884 = vunpack.c.l.b16 %v1788
    %v1885 = vunpack.c.l.b16 %v1789
    %v1886 = vunpack.c.l.b16 %v1790
    %v1887 = vunpack.c.l.b16 %v1791
    %v1888 = vunpack.c.l.b16 %v1792
    %v1889 = vunpack.c.l.b16 %v1793
    %v1890 = vunpack.c.l.b16 %v1794
    %v1891 = vunpack.c.l.b16 %v1795
    %v1892 = vunpack.c.l.b16 %v1796
    %v1893 = vunpack.c.l.b16 %v1797
    %v1894 = vunpack.c.l.b16 %v1798
    %v1895 = vunpack.c.l.b16 %v1799
    %v1896 = vunpack.c.l.b16 %v1800
    %v1897 = vunpack.c.l.b16 %v1801
    %v1898 = vunpack.c.l.b16 %v1802
    %v1899 = vunpack.c.l.b16 %v1803
    %v1900 = vpack.c.b16 %v1853, %v1852
    %v1901 = vpack.c.b16 %v1855, %v1854
    %v1902 = vpack.c.b16 %v1857, %v1856
    %v1903 = vpack.c.b16 %v1859, %v1858
    %v1904 = vpack.c.b16 %v1861, %v1860
    %v1905 = vpack.c.b16 %v1863, %v1862
    %v1906 = vpack.c.b16 %v1865, %v1864
    %v1907 = vpack.c.b16 %v1867, %v1866
    %v1908 = vpack.c.b16 %v1869, %v1868
    %v1909 = vpack.c.b16 %v1871, %v1870
    %v1910 = vpack.c.b16 %v1873, %v1872
    %v1911 = vpack.c.b16 %v1875, %v1874
    %v1912 = vpack.c.b16 %v1877, %v1876
    %v1913 = vpack.c.b16 %v1879, %v1878
    %v1914 = vpack.c.b16 %v1881, %v1880
    %v1915 = vpack.c.b16 %v1883, %v1882
    %v1916 = vpack.c.b16 %v1885, %v1884
    %v1917 = vpack.c.b16 %v1887, %v1886
    %v1918 = vpack.c.b16 %v1889, %v1888
    %v1919 = vpack.c.b16 %v1891, %v1890
    %v1920 = vpack.c.b16 %v1893, %v1892
    %v1921 = vpack.c.b16 %v1895, %v1894
    %v1922 = vpack.c.b16 %v1897, %v1896
    %v1923 = vpack.c.b16 %v1899, %v1898
    %1948 = vmatprep.subr.bf16.mxu0 0
    %1949 = vmatpush1.bf16.msra.mxu0 %v1900
    %1950 = vmatprep.subr.bf16.mxu0 0
    %1951 = vmatpush1.bf16.msra.mxu0 %v1901
    %1952 = vmatprep.subr.bf16.mxu0 0
    %1953 = vmatpush1.bf16.msra.mxu0 %v1902
    %1954 = vmatprep.subr.bf16.mxu0 0
    %1955 = vmatpush1.bf16.msra.mxu0 %v1903
    %1956 = vmatprep.subr.bf16.mxu0 0
    %1957 = vmatpush1.bf16.msra.mxu0 %v1904
    %1958 = vmatprep.subr.bf16.mxu0 0
    %1959 = vmatpush1.bf16.msra.mxu0 %v1905
    %1960 = vmatprep.subr.bf16.mxu0 0
    %1961 = vmatpush1.bf16.msra.mxu0 %v1906
    %1962 = vmatprep.subr.bf16.mxu0 0
    %1963 = vmatpush1.bf16.msra.mxu0 %v1907
    %1964 = vmatprep.subr.bf16.mxu0 0
    %1965 = vmatpush1.bf16.msra.mxu0 %v1908
    %1966 = vmatprep.subr.bf16.mxu0 0
    %1967 = vmatpush1.bf16.msra.mxu0 %v1909
    %1968 = vmatprep.subr.bf16.mxu0 0
    %1969 = vmatpush1.bf16.msra.mxu0 %v1910
    %1970 = vmatprep.subr.bf16.mxu0 0
    %1971 = vmatpush1.bf16.msra.mxu0 %v1911
    %1972 = vmatprep.subr.bf16.mxu0 0
    %1973 = vmatpush1.bf16.msra.mxu0 %v1912
    %1974 = vmatprep.subr.bf16.mxu0 0
    %1975 = vmatpush1.bf16.msra.mxu0 %v1913
    %1976 = vmatprep.subr.bf16.mxu0 0
    %1977 = vmatpush1.bf16.msra.mxu0 %v1914
    %1978 = vmatprep.subr.bf16.mxu0 0
    %1979 = vmatpush1.bf16.msra.mxu0 %v1915
    %1980 = vmatprep.mubr.bf16.mxu0 %v1754
    %1981 = vmatmul.mubr.bf16.gmra.mrb[0].mxu0 %v1753
    %v1982 = vpop.f32.mrb[0].mxu0
    %v1983 = vadd.f32 0.0, %v1982
    %v1984 = vpop.f32.mrb[0].mxu0
    %v1985 = vpop.f32.mrb[0].mxu0
    %v1986 = vpop.f32.mrb[0].mxu0
    %1987 = vdwg.mxu0
    %1988 = vmatprep.subr.bf16.mxu0 0
    %1989 = vmatpush1.bf16.msra.mxu0 %v1916
    %1990 = vmatprep.subr.bf16.mxu0 0
    %1991 = vmatpush1.bf16.msra.mxu0 %v1917
    %1992 = vmatprep.subr.bf16.mxu0 0
    %1993 = vmatpush1.bf16.msra.mxu0 %v1918
    %1994 = vmatprep.subr.bf16.mxu0 0
    %1995 = vmatpush1.bf16.msra.mxu0 %v1919
    %1996 = vmatprep.subr.bf16.mxu0 0
    %1997 = vmatpush1.bf16.msra.mxu0 %v1920
    %1998 = vmatprep.subr.bf16.mxu0 0
    %1999 = vmatpush1.bf16.msra.mxu0 %v1921
    %2000 = vmatprep.subr.bf16.mxu0 0
    %2001 = vmatpush1.bf16.msra.mxu0 %v1922
    %2002 = vmatprep.subr.bf16.mxu0 0
    %2003 = vmatpush1.bf16.msra.mxu0 %v1923
    %2004 = vmatprep.subr.bf16.mxu0 0
    %2005 = vmatpush1.bf16.msra.mxu0 0
    %2006 = vmatprep.subr.bf16.mxu0 0
    %2007 = vmatpush1.bf16.msra.mxu0 0
    %2008 = vmatprep.subr.bf16.mxu0 0
    %2009 = vmatpush1.bf16.msra.mxu0 0
    %2010 = vmatprep.subr.bf16.mxu0 0
    %2011 = vmatpush1.bf16.msra.mxu0 0
    %2012 = vmatprep.subr.bf16.mxu0 0
    %2013 = vmatpush1.bf16.msra.mxu0 0
    %2014 = vmatprep.subr.bf16.mxu0 0
    %2015 = vmatpush1.bf16.msra.mxu0 0
    %2016 = vmatprep.subr.bf16.mxu0 0
    %2017 = vmatpush1.bf16.msra.mxu0 0
    %2018 = vmatprep.subr.bf16.mxu0 0
    %2019 = vmatpush1.bf16.msra.mxu0 0
    %2020 = vmatprep.mubr.bf16.mxu0 0
    %2021 = vmatmul.mubr.bf16.gmra.mrb[0].mxu0 %v1755
    %v2022 = vpop.f32.mrb[0].mxu0
    %v2023 = vadd.f32 %v1983, %v2022
    %v2024 = vpop.f32.mrb[0].mxu0
    %v2025 = vpop.f32.mrb[0].mxu0
    %v2026 = vpop.f32.mrb[0].mxu0
    %2027 = vdwg.mxu0
    %v2028 = vadd.f32 %v1752, %v2023
    %2029 = vst [vmem:[#allocation8] sm:$0x3] %v2028
    // Predicated region
    $region34: #{tpu_custom_call.1} parent=1 // pred_check
      _
    $region35: #{tpu_custom_call.1} parent=1 // pred_check_branch
      %2031 = sbr.rel (0) target = $region37
    $region36: #{tpu_custom_call.1} parent=1 // pred_region
      %s2033 = ssub.s32 32, 32
      %2034 = vsyncadd [#allocation4], %s2033
      %s2036 = sshll.u32 [#allocation8], 4
      %s2037 = int_to_ptr.vmem [resolvable:$true] %s2036
      %2039 = dma.vmem_to_hbm [thread:$0]  %s2037, 32, %s4, [#allocation4]
    $region37: #{tpu_custom_call.1} parent=1 // pred_fallthru
      _
    // Predicated region
    $region38: #{tpu_custom_call.1} parent=1 // pred_check
      _
    $region39: #{tpu_custom_call.1} parent=1 // pred_check_branch
      %2041 = sbr.rel (0) target = $region41
    $region40: #{tpu_custom_call.1} parent=1 // pred_region
      %2042 = dma.done [#allocation4], 32
    $region41: #{tpu_custom_call.1} parent=1 // pred_fallthru
      _
    %2043 = vsyncpa [#allocation3], 1
    %2044 = vsyncpa [#allocation6], 1
    %2045 = vsyncpa [#allocation4], 1

</llo_original>
